<compile_context>
chip_gen: v7x
topology: tpu7x:2x2x1
jax: 0.10.0
libtpu: 0.0.40
codegen_flags: <defaults>
</compile_context>

<pallas_src>
import jax
import jax.numpy as jnp
from jax.experimental import pallas as pl
from jax.experimental.pallas import tpu as pltpu

LN_EPS = 1e-5              # torch.nn.LayerNorm default
GEOM_FEATS = 39 + 1 + 3    # distogram | backbone-frame mask | unit vector


def _normalize(x):
    """LayerNorm statistics (no affine) in f32, one pass (mean + mean of squares)."""
    x = x.astype(jnp.float32)
    m = jnp.mean(x, axis=-1, keepdims=True)
    ms = jnp.mean(x * x, axis=-1, keepdims=True)
    var = jnp.maximum(ms - m * m, 0.0)
    return (x - m) * jax.lax.rsqrt(var + LN_EPS)


def _template_embedder_kernel(
    pair_ref,      # (TI, N, P)     bf16  pair_rep tile (rows i, all cols j)
    geom_ref,      # (T, TI, N, Cg) bf16  dist | mask | unit_vec tile
    ri_ref,        # (T, TI, E)     f32   restype_i @ W_a[43:43+R] + b_a
    rj_ref,        # (T, N, E)      f32   restype_j @ W_a[43+R:]
    pe_gamma_ref,  # (1, P)  f32
    pe_beta_ref,   # (1, P)  f32
    w_pe_ref,      # (P, E)  f32
    w_geom_ref,    # (Cg, E) bf16
    ln_gamma_ref,  # (1, E)  f32
    ln_beta_ref,   # (1, E)  f32
    w_tr_ref,      # (E, P)  f32
    out_ref,       # (TI, N, P)  f32
):
    num_t = geom_ref.shape[0]
    ti, n, p = pair_ref.shape
    cg = geom_ref.shape[-1]
    e = w_pe_ref.shape[1]
    rows = ti * n

    # pair_embedder: LayerNorm(P) -> Linear(P, E, bias=False)
    pair = pair_ref[...].reshape(rows, p)
    pair_ln = _normalize(pair) * pe_gamma_ref[...] + pe_beta_ref[...]
    pair_emb = jnp.dot(pair_ln, w_pe_ref[...],
                       preferred_element_type=jnp.float32)            # (rows, E)
    pair_emb = pair_emb.reshape(ti, n, e)

    # self.linear on the geometry features: one tall bf16 matmul for all templates.
    geom = geom_ref[...].reshape(num_t * rows, cg)
    g_emb = jnp.dot(geom, w_geom_ref[...],
                    preferred_element_type=jnp.float32)                # (T*rows, E)
    g_emb = g_emb.reshape(num_t, ti, n, e)

    ri = ri_ref[...]          # (T, TI, E)  (bias b_a already folded in)
    rj = rj_ref[...]          # (T, N,  E)

    # u = mean_t LayerNorm(v_t).  The per-feature affine commutes with the mean,
    # so accumulate the un-affined normalized value and apply gamma/beta once.
    acc = jnp.zeros((ti, n, e), jnp.float32)
    for t in range(num_t):    # T is small & static -> unrolled
        v_t = pair_emb + g_emb[t] + ri[t][:, None, :] + rj[t][None, :, :]
        acc = acc + _normalize(v_t)
    u = (acc * (1.0 / num_t)) * ln_gamma_ref[...] + ln_beta_ref[...]

    # transition: ReLU -> Linear(E, P, bias=False)
    out = jnp.dot(jnp.maximum(u.reshape(rows, e), 0.0), w_tr_ref[...],
                  preferred_element_type=jnp.float32)
    out_ref[...] = out.reshape(ti, n, p).astype(out_ref.dtype)


def _choose_tile_i(num_res, num_t, P, E, target_bytes=4 << 20):
    """Residue-rows per tile: ~4 MiB of streamed data, multiple of 8 sublanes."""
    per_i = num_t * num_res * GEOM_FEATS * 2 + num_res * P * 6 + num_t * E * 8
    t = int(max(1, target_bytes // max(per_i, 1)))
    if t >= num_res:
        return num_res
    return max(8, (t // 8) * 8)


def template_embedder_forward(features, pair_rep, params, *, tile_i=None):
    """Replicates TemplateEmbedder.forward (Pairformer stack run as identity)."""
    restype = features["template_restype"]            # (T, N, R)
    mask = features["template_backbone_frame_mask"]   # (T, N) bool
    dist = features["template_distogram"]             # (T, N, N, 39)
    unit_vec = features["template_unit_vector"]       # (T, N, N, 3)

    num_res = pair_rep.shape[0]
    P = pair_rep.shape[-1]
    E = params["w_pe"].shape[1]

    if restype.shape[-3] == 0:
        # transition(zeros) == 0 because its Linear has no bias.
        return jnp.zeros((num_res, num_res, P), pair_rep.dtype)

    num_t, _, R = restype.shape
    Cg = GEOM_FEATS

    # ---- glue (tiny, stays in XLA) -------------------------------------------
    # Stream only the true geometry features in bf16.  The restype terms of
    # a @ W_a are rank-1 in the (i, j) plane, so compute them once as (T, N, E)
    # and broadcast inside the kernel instead of duplicating (T,N,R) data N x in HBM.
    b = jnp.logical_and(mask[..., :, None], mask[..., None, :])
    geom = jnp.concatenate(
        [dist.astype(jnp.bfloat16),
         b[..., None].astype(jnp.bfloat16),
         unit_vec.astype(jnp.bfloat16)],
        axis=-1)                                        # (T, N, N, Cg) bf16

    w_a = params["w_a"].astype(jnp.float32)             # (Cg + 2R, E)
    w_geom = w_a[:Cg].astype(jnp.bfloat16)
    rest = restype.astype(jnp.float32)
    ri_emb = rest @ w_a[Cg:Cg + R] + params["b_a"].astype(jnp.float32)   # (T, N, E)
    rj_emb = rest @ w_a[Cg + R:Cg + 2 * R]                               # (T, N, E)

    pair_bf16 = pair_rep.astype(jnp.bfloat16)            # (N, N, P)

    # ---- tiling / resources ---------------------------------------------------
    if tile_i is None:
        tile_i = _choose_tile_i(num_res, num_t, P, E)
    tile_i = int(min(tile_i, num_res))
    if tile_i < num_res:
        tile_i = min(num_res, max(8, (tile_i // 8) * 8))
    grid = (pl.cdiv(num_res, tile_i),)

    rows = tile_i * num_res
    tile_io_bytes = (rows * P * 2                    # pair tile (bf16)
                     + num_t * rows * Cg * 2         # geom tile (bf16)
                     + num_t * tile_i * E * 4        # ri tile
                     + num_t * num_res * E * 4       # rj (resident)
                     + rows * P * 4)                 # out tile (f32)
    weight_bytes = P * E * 4 + Cg * E * 2 + E * P * 4 + 4 * (P + E) * 4
    interm_bytes = (num_t + 4) * rows * E * 4
    vmem_limit = int(min(64 << 20,
                         2 * (tile_io_bytes + weight_bytes) + interm_bytes + (8 << 20)))

    M = num_res * num_res
    cost = pl.CostEstimate(
        flops=int(2 * M * (P * E + num_t * Cg * E + E * P)),
        transcendentals=int(M * (num_t + 1)),
        bytes_accessed=int(geom.size * 2 + pair_bf16.size * 2 + M * P * 4
                           + (ri_emb.size + rj_emb.size) * 4 + weight_bytes))

    grid_spec = pltpu.PrefetchScalarGridSpec(
        num_scalar_prefetch=0,
        grid=grid,
        in_specs=[
            pl.BlockSpec((tile_i, num_res, P), lambda i: (i, 0, 0)),            # pair
            pl.BlockSpec((num_t, tile_i, num_res, Cg), lambda i: (0, i, 0, 0)),  # geom
            pl.BlockSpec((num_t, tile_i, E), lambda i: (0, i, 0)),               # ri
            pl.BlockSpec((num_t, num_res, E), lambda i: (0, 0, 0)),              # rj
            pl.BlockSpec((1, P), lambda i: (0, 0)),                              # pe_gamma
            pl.BlockSpec((1, P), lambda i: (0, 0)),                              # pe_beta
            pl.BlockSpec((P, E), lambda i: (0, 0)),                              # w_pe
            pl.BlockSpec((Cg, E), lambda i: (0, 0)),                             # w_geom
            pl.BlockSpec((1, E), lambda i: (0, 0)),                              # ln_gamma
            pl.BlockSpec((1, E), lambda i: (0, 0)),                              # ln_beta
            pl.BlockSpec((E, P), lambda i: (0, 0)),                              # w_tr
        ],
        out_specs=pl.BlockSpec((tile_i, num_res, P), lambda i: (i, 0, 0)),
    )

    out = pl.pallas_call(
        _template_embedder_kernel,
        out_shape=jax.ShapeDtypeStruct((num_res, num_res, P), jnp.float32),
        grid_spec=grid_spec,
        compiler_params=pltpu.CompilerParams(
            dimension_semantics=("parallel",),      # 2 TCs on v7x; harmless elsewhere
            vmem_limit_bytes=vmem_limit),
        cost_estimate=cost,
    )(
        pair_bf16, geom, ri_emb, rj_emb,
        params["pe_gamma"].reshape(1, P).astype(jnp.float32),
        params["pe_beta"].reshape(1, P).astype(jnp.float32),
        params["w_pe"].astype(jnp.float32),
        w_geom,
        params["ln_gamma"].reshape(1, E).astype(jnp.float32),
        params["ln_beta"].reshape(1, E).astype(jnp.float32),
        params["w_tr"].astype(jnp.float32),
    )
    return out.astype(pair_rep.dtype)


# --------------------------- pure-JAX f32 reference ----------------------------
def _ln_ref(x, gamma, beta):
    mean = jnp.mean(x, axis=-1, keepdims=True)
    var = jnp.mean(jnp.square(x - mean), axis=-1, keepdims=True)
    return (x - mean) * jax.lax.rsqrt(var + LN_EPS) * gamma + beta


def _reference_forward(features, pair_rep, params):
    restype = features["template_restype"].astype(jnp.float32)
    mask = features["template_backbone_frame_mask"]
    dist = features["template_distogram"].astype(jnp.float32)
    unit_vec = features["template_unit_vector"].astype(jnp.float32)
    T, N, R = restype.shape

    b = jnp.logical_and(mask[..., :, None], mask[..., None, :]).astype(jnp.float32)
    rest_i = jnp.broadcast_to(restype[:, :, None, :], (T, N, N, R))
    rest_j = jnp.broadcast_to(restype[:, None, :, :], (T, N, N, R))
    a = jnp.concatenate([dist, b[..., None], unit_vec, rest_i, rest_j], axis=-1)

    pair_ln = _ln_ref(pair_rep, params["pe_gamma"], params["pe_beta"])
    pair_emb = pair_ln @ params["w_pe"]
    v = pair_emb[None] + a @ params["w_a"] + params["b_a"]
    u = _ln_ref(v, params["ln_gamma"], params["ln_beta"]).mean(axis=-4)
    return jnp.maximum(u, 0.0) @ params["w_tr"]


if __name__ == "__main__":
    T, N = 2, 16            # templates, residues
    P, E = 128, 128         # pair_embedding_size, template_embedding_size (lane-dense)
    R = 32                  # len(RESIDUE_INDEX_MSA) (synthetic)
    C = GEOM_FEATS + 2 * R  # template_input_size

    key = jax.random.PRNGKey(0)
    ks = jax.random.split(key, 14)

    # Production-like template features: one-hot distogram/restype, unit vectors.
    dist = jax.nn.one_hot(jax.random.randint(ks[0], (T, N, N), 0, 39), 39,
                          dtype=jnp.float32)
    uv = jax.random.normal(ks[1], (T, N, N, 3), jnp.float32)
    uv = uv / jnp.linalg.norm(uv, axis=-1, keepdims=True)
    restype = jax.nn.one_hot(jax.random.randint(ks[2], (T, N), 0, R), R,
                             dtype=jnp.float32)
    features = {
        "template_backbone_frame_mask": jax.random.bernoulli(ks[3], 0.8, (T, N)),
        "template_distogram": dist,
        "template_unit_vector": uv,
        "template_restype": restype,
    }
    pair_rep = jax.random.normal(ks[4], (N, N, P), jnp.float32)

    params = {
        "pe_gamma": 1.0 + 0.1 * jax.random.normal(ks[5], (P,), jnp.float32),
        "pe_beta": 0.1 * jax.random.normal(ks[6], (P,), jnp.float32),
        "w_pe": 0.05 * jax.random.normal(ks[7], (P, E), jnp.float32),
        "w_a": 0.05 * jax.random.normal(ks[8], (C, E), jnp.float32),
        "b_a": 0.05 * jax.random.normal(ks[9], (E,), jnp.float32),
        "ln_gamma": 1.0 + 0.1 * jax.random.normal(ks[10], (E,), jnp.float32),
        "ln_beta": 0.1 * jax.random.normal(ks[11], (E,), jnp.float32),
        "w_tr": 0.05 * jax.random.normal(ks[12], (E, P), jnp.float32),
    }

    # tile_i=8 with N=16 -> grid=(2,), exercising the row-tiled pipeline.
    out = template_embedder_forward(features, pair_rep, params, tile_i=8)
    out = jax.block_until_ready(out)

    ref = _reference_forward(features, pair_rep, params)
    assert out.shape == (N, N, P)
    # bf16 streaming of pair/geom -> compare against the f32 reference with a
    # bf16-appropriate tolerance.
    max_err = float(jnp.max(jnp.abs(out - ref)))
    assert jnp.allclose(out, ref, atol=2e-2, rtol=2e-2), (
        f"mismatch vs reference, max abs err {max_err}")

    print("KERNEL_OK")
</pallas_src>

<mosaic_0001>
module attributes {stable_mosaic.version = 11 : i64} {
  func.func @_template_embedder_kernel(%arg0: i32, %arg1: memref<8x16x128xbf16, #tpu.memory_space<vmem>>, %arg2: memref<2x8x16x43xbf16, #tpu.memory_space<vmem>>, %arg3: memref<2x8x128xf32, #tpu.memory_space<vmem>>, %arg4: memref<2x16x128xf32, #tpu.memory_space<vmem>>, %arg5: memref<1x128xf32, #tpu.memory_space<vmem>>, %arg6: memref<1x128xf32, #tpu.memory_space<vmem>>, %arg7: memref<128x128xf32, #tpu.memory_space<vmem>>, %arg8: memref<43x128xbf16, #tpu.memory_space<vmem>>, %arg9: memref<1x128xf32, #tpu.memory_space<vmem>>, %arg10: memref<1x128xf32, #tpu.memory_space<vmem>>, %arg11: memref<128x128xf32, #tpu.memory_space<vmem>>, %arg12: memref<8x16x128xf32, #tpu.memory_space<vmem>>) attributes {dimension_semantics = [#tpu.dimension_semantics<parallel>], iteration_bounds = array<i64: 2>, scalar_prefetch = 0 : i64, scratch_operands = 0 : i64, tpu.core_type = #tpu.core_type<tc>, window_params = [{transform_indices = @transform_0, window_bounds = array<i64: 8, 16, 128>}, {transform_indices = @transform_1, window_bounds = array<i64: 2, 8, 16, 43>}, {transform_indices = @transform_2, window_bounds = array<i64: 2, 8, 128>}, {pipeline_mode = #tpu.pipeline_mode<synchronous>, transform_indices = @transform_3, window_bounds = array<i64: 2, 16, 128>}, {pipeline_mode = #tpu.pipeline_mode<synchronous>, transform_indices = @transform_4, window_bounds = array<i64: 1, 128>}, {pipeline_mode = #tpu.pipeline_mode<synchronous>, transform_indices = @transform_5, window_bounds = array<i64: 1, 128>}, {pipeline_mode = #tpu.pipeline_mode<synchronous>, transform_indices = @transform_6, window_bounds = array<i64: 128, 128>}, {pipeline_mode = #tpu.pipeline_mode<synchronous>, transform_indices = @transform_7, window_bounds = array<i64: 43, 128>}, {pipeline_mode = #tpu.pipeline_mode<synchronous>, transform_indices = @transform_8, window_bounds = array<i64: 1, 128>}, {pipeline_mode = #tpu.pipeline_mode<synchronous>, transform_indices = @transform_9, window_bounds = array<i64: 1, 128>}, {pipeline_mode = #tpu.pipeline_mode<synchronous>, transform_indices = @transform_10, window_bounds = array<i64: 128, 128>}, {transform_indices = @transform_11, window_bounds = array<i64: 8, 16, 128>}]} {
    %c0 = arith.constant 0 : index
    %c0_0 = arith.constant 0 : index
    %c0_1 = arith.constant 0 : index
    %0 = vector.load %arg1[%c0, %c0_0, %c0_1] : memref<8x16x128xbf16, #tpu.memory_space<vmem>>, vector<8x16x128xbf16>
    %1 = vector.shape_cast %0 : vector<8x16x128xbf16> to vector<128x128xbf16>
    %2 = arith.extf %1 : vector<128x128xbf16> to vector<128x128xf32>
    %cst = arith.constant dense<0.000000e+00> : vector<128xf32>
    %3 = vector.multi_reduction <add>, %2, %cst [1] : vector<128x128xf32> to vector<128xf32>
    %4 = vector.shape_cast %3 : vector<128xf32> to vector<128x1xf32>
    %cst_2 = arith.constant 1.280000e+02 : f32
    %5 = vector.broadcast %cst_2 : f32 to vector<128x1xf32>
    %6 = arith.divf %4, %5 : vector<128x1xf32>
    %7 = arith.mulf %2, %2 : vector<128x128xf32>
    %cst_3 = arith.constant dense<0.000000e+00> : vector<128xf32>
    %8 = vector.multi_reduction <add>, %7, %cst_3 [1] : vector<128x128xf32> to vector<128xf32>
    %9 = vector.shape_cast %8 : vector<128xf32> to vector<128x1xf32>
    %cst_4 = arith.constant 1.280000e+02 : f32
    %10 = vector.broadcast %cst_4 : f32 to vector<128x1xf32>
    %11 = arith.divf %9, %10 : vector<128x1xf32>
    %12 = arith.mulf %6, %6 : vector<128x1xf32>
    %13 = arith.subf %11, %12 : vector<128x1xf32>
    %cst_5 = arith.constant 0.000000e+00 : f32
    %14 = vector.broadcast %cst_5 : f32 to vector<128x1xf32>
    %15 = arith.maximumf %13, %14 : vector<128x1xf32>
    %16 = vector.broadcast %6 : vector<128x1xf32> to vector<128x128xf32>
    %17 = arith.subf %2, %16 : vector<128x128xf32>
    %cst_6 = arith.constant 9.99999974E-6 : f32
    %18 = vector.broadcast %cst_6 : f32 to vector<128x1xf32>
    %19 = arith.addf %15, %18 : vector<128x1xf32>
    %20 = math.rsqrt %19 : vector<128x1xf32>
    %21 = vector.broadcast %20 : vector<128x1xf32> to vector<128x128xf32>
    %22 = arith.mulf %17, %21 : vector<128x128xf32>
    %c0_7 = arith.constant 0 : index
    %c0_8 = arith.constant 0 : index
    %23 = vector.load %arg5[%c0_7, %c0_8] : memref<1x128xf32, #tpu.memory_space<vmem>>, vector<1x128xf32>
    %24 = vector.broadcast %23 : vector<1x128xf32> to vector<128x128xf32>
    %25 = arith.mulf %22, %24 : vector<128x128xf32>
    %c0_9 = arith.constant 0 : index
    %c0_10 = arith.constant 0 : index
    %26 = vector.load %arg6[%c0_9, %c0_10] : memref<1x128xf32, #tpu.memory_space<vmem>>, vector<1x128xf32>
    %27 = vector.broadcast %26 : vector<1x128xf32> to vector<128x128xf32>
    %28 = arith.addf %25, %27 : vector<128x128xf32>
    %c0_11 = arith.constant 0 : index
    %c0_12 = arith.constant 0 : index
    %29 = vector.load %arg7[%c0_11, %c0_12] : memref<128x128xf32, #tpu.memory_space<vmem>>, vector<128x128xf32>
    %cst_13 = arith.constant dense<0.000000e+00> : vector<128x128xf32>
    %30 = tpu.matmul %28, %29, %cst_13 {dimension_numbers = #tpu.dot_dimension_numbers<[1], [0], [0], [1], [0, 0, 1, 1], [], []>} : vector<128x128xf32>, vector<128x128xf32>, vector<128x128xf32> -> vector<128x128xf32>
    %31 = vector.shape_cast %30 : vector<128x128xf32> to vector<8x16x128xf32>
    %c0_14 = arith.constant 0 : index
    %c0_15 = arith.constant 0 : index
    %c0_16 = arith.constant 0 : index
    %c0_17 = arith.constant 0 : index
    %32 = vector.load %arg2[%c0_14, %c0_15, %c0_16, %c0_17] : memref<2x8x16x43xbf16, #tpu.memory_space<vmem>>, vector<2x8x16x43xbf16>
    %33 = vector.shape_cast %32 : vector<2x8x16x43xbf16> to vector<256x43xbf16>
    %c0_18 = arith.constant 0 : index
    %c0_19 = arith.constant 0 : index
    %34 = vector.load %arg8[%c0_18, %c0_19] : memref<43x128xbf16, #tpu.memory_space<vmem>>, vector<43x128xbf16>
    %cst_20 = arith.constant dense<0.000000e+00> : vector<256x128xf32>
    %35 = tpu.matmul %33, %34, %cst_20 {dimension_numbers = #tpu.dot_dimension_numbers<[1], [0], [0], [1], [0, 0, 1, 1], [], []>} : vector<256x43xbf16>, vector<43x128xbf16>, vector<256x128xf32> -> vector<256x128xf32>
    %36 = vector.shape_cast %35 : vector<256x128xf32> to vector<2x8x16x128xf32>
    %c0_21 = arith.constant 0 : index
    %c0_22 = arith.constant 0 : index
    %c0_23 = arith.constant 0 : index
    %37 = vector.load %arg3[%c0_21, %c0_22, %c0_23] : memref<2x8x128xf32, #tpu.memory_space<vmem>>, vector<2x8x128xf32>
    %c0_24 = arith.constant 0 : index
    %c0_25 = arith.constant 0 : index
    %c0_26 = arith.constant 0 : index
    %38 = vector.load %arg4[%c0_24, %c0_25, %c0_26] : memref<2x16x128xf32, #tpu.memory_space<vmem>>, vector<2x16x128xf32>
    %cst_27 = arith.constant 0.000000e+00 : f32
    %39 = vector.broadcast %cst_27 : f32 to vector<8x16x128xf32>
    %40 = vector.extract_strided_slice %36 {offsets = [0, 0, 0, 0], sizes = [1, 8, 16, 128], strides = [1, 1, 1, 1]} : vector<2x8x16x128xf32> to vector<1x8x16x128xf32>
    %41 = vector.shape_cast %40 : vector<1x8x16x128xf32> to vector<8x16x128xf32>
    %42 = arith.addf %31, %41 : vector<8x16x128xf32>
    %43 = vector.extract_strided_slice %37 {offsets = [0, 0, 0], sizes = [1, 8, 128], strides = [1, 1, 1]} : vector<2x8x128xf32> to vector<1x8x128xf32>
    %44 = vector.shape_cast %43 : vector<1x8x128xf32> to vector<8x128xf32>
    %45 = vector.shape_cast %44 : vector<8x128xf32> to vector<8x1x128xf32>
    %46 = vector.broadcast %45 : vector<8x1x128xf32> to vector<8x16x128xf32>
    %47 = arith.addf %42, %46 : vector<8x16x128xf32>
    %48 = vector.extract_strided_slice %38 {offsets = [0, 0, 0], sizes = [1, 16, 128], strides = [1, 1, 1]} : vector<2x16x128xf32> to vector<1x16x128xf32>
    %49 = vector.shape_cast %48 : vector<1x16x128xf32> to vector<16x128xf32>
    %50 = vector.shape_cast %49 : vector<16x128xf32> to vector<1x16x128xf32>
    %51 = vector.broadcast %50 : vector<1x16x128xf32> to vector<8x16x128xf32>
    %52 = arith.addf %47, %51 : vector<8x16x128xf32>
    %cst_28 = arith.constant dense<0.000000e+00> : vector<8x16xf32>
    %53 = vector.multi_reduction <add>, %52, %cst_28 [2] : vector<8x16x128xf32> to vector<8x16xf32>
    %54 = vector.shape_cast %53 : vector<8x16xf32> to vector<8x16x1xf32>
    %cst_29 = arith.constant 1.280000e+02 : f32
    %55 = vector.broadcast %cst_29 : f32 to vector<8x16x1xf32>
    %56 = arith.divf %54, %55 : vector<8x16x1xf32>
    %57 = arith.mulf %52, %52 : vector<8x16x128xf32>
    %cst_30 = arith.constant dense<0.000000e+00> : vector<8x16xf32>
    %58 = vector.multi_reduction <add>, %57, %cst_30 [2] : vector<8x16x128xf32> to vector<8x16xf32>
    %59 = vector.shape_cast %58 : vector<8x16xf32> to vector<8x16x1xf32>
    %cst_31 = arith.constant 1.280000e+02 : f32
    %60 = vector.broadcast %cst_31 : f32 to vector<8x16x1xf32>
    %61 = arith.divf %59, %60 : vector<8x16x1xf32>
    %62 = arith.mulf %56, %56 : vector<8x16x1xf32>
    %63 = arith.subf %61, %62 : vector<8x16x1xf32>
    %cst_32 = arith.constant 0.000000e+00 : f32
    %64 = vector.broadcast %cst_32 : f32 to vector<8x16x1xf32>
    %65 = arith.maximumf %63, %64 : vector<8x16x1xf32>
    %66 = vector.broadcast %56 : vector<8x16x1xf32> to vector<8x16x128xf32>
    %67 = arith.subf %52, %66 : vector<8x16x128xf32>
    %cst_33 = arith.constant 9.99999974E-6 : f32
    %68 = vector.broadcast %cst_33 : f32 to vector<8x16x1xf32>
    %69 = arith.addf %65, %68 : vector<8x16x1xf32>
    %70 = math.rsqrt %69 : vector<8x16x1xf32>
    %71 = vector.broadcast %70 : vector<8x16x1xf32> to vector<8x16x128xf32>
    %72 = arith.mulf %67, %71 : vector<8x16x128xf32>
    %73 = arith.addf %39, %72 : vector<8x16x128xf32>
    %74 = vector.extract_strided_slice %36 {offsets = [1, 0, 0, 0], sizes = [1, 8, 16, 128], strides = [1, 1, 1, 1]} : vector<2x8x16x128xf32> to vector<1x8x16x128xf32>
    %75 = vector.shape_cast %74 : vector<1x8x16x128xf32> to vector<8x16x128xf32>
    %76 = arith.addf %31, %75 : vector<8x16x128xf32>
    %77 = vector.extract_strided_slice %37 {offsets = [1, 0, 0], sizes = [1, 8, 128], strides = [1, 1, 1]} : vector<2x8x128xf32> to vector<1x8x128xf32>
    %78 = vector.shape_cast %77 : vector<1x8x128xf32> to vector<8x128xf32>
    %79 = vector.shape_cast %78 : vector<8x128xf32> to vector<8x1x128xf32>
    %80 = vector.broadcast %79 : vector<8x1x128xf32> to vector<8x16x128xf32>
    %81 = arith.addf %76, %80 : vector<8x16x128xf32>
    %82 = vector.extract_strided_slice %38 {offsets = [1, 0, 0], sizes = [1, 16, 128], strides = [1, 1, 1]} : vector<2x16x128xf32> to vector<1x16x128xf32>
    %83 = vector.shape_cast %82 : vector<1x16x128xf32> to vector<16x128xf32>
    %84 = vector.shape_cast %83 : vector<16x128xf32> to vector<1x16x128xf32>
    %85 = vector.broadcast %84 : vector<1x16x128xf32> to vector<8x16x128xf32>
    %86 = arith.addf %81, %85 : vector<8x16x128xf32>
    %cst_34 = arith.constant dense<0.000000e+00> : vector<8x16xf32>
    %87 = vector.multi_reduction <add>, %86, %cst_34 [2] : vector<8x16x128xf32> to vector<8x16xf32>
    %88 = vector.shape_cast %87 : vector<8x16xf32> to vector<8x16x1xf32>
    %cst_35 = arith.constant 1.280000e+02 : f32
    %89 = vector.broadcast %cst_35 : f32 to vector<8x16x1xf32>
    %90 = arith.divf %88, %89 : vector<8x16x1xf32>
    %91 = arith.mulf %86, %86 : vector<8x16x128xf32>
    %cst_36 = arith.constant dense<0.000000e+00> : vector<8x16xf32>
    %92 = vector.multi_reduction <add>, %91, %cst_36 [2] : vector<8x16x128xf32> to vector<8x16xf32>
    %93 = vector.shape_cast %92 : vector<8x16xf32> to vector<8x16x1xf32>
    %cst_37 = arith.constant 1.280000e+02 : f32
    %94 = vector.broadcast %cst_37 : f32 to vector<8x16x1xf32>
    %95 = arith.divf %93, %94 : vector<8x16x1xf32>
    %96 = arith.mulf %90, %90 : vector<8x16x1xf32>
    %97 = arith.subf %95, %96 : vector<8x16x1xf32>
    %cst_38 = arith.constant 0.000000e+00 : f32
    %98 = vector.broadcast %cst_38 : f32 to vector<8x16x1xf32>
    %99 = arith.maximumf %97, %98 : vector<8x16x1xf32>
    %100 = vector.broadcast %90 : vector<8x16x1xf32> to vector<8x16x128xf32>
    %101 = arith.subf %86, %100 : vector<8x16x128xf32>
    %cst_39 = arith.constant 9.99999974E-6 : f32
    %102 = vector.broadcast %cst_39 : f32 to vector<8x16x1xf32>
    %103 = arith.addf %99, %102 : vector<8x16x1xf32>
    %104 = math.rsqrt %103 : vector<8x16x1xf32>
    %105 = vector.broadcast %104 : vector<8x16x1xf32> to vector<8x16x128xf32>
    %106 = arith.mulf %101, %105 : vector<8x16x128xf32>
    %107 = arith.addf %73, %106 : vector<8x16x128xf32>
    %cst_40 = arith.constant 5.000000e-01 : f32
    %108 = vector.broadcast %cst_40 : f32 to vector<8x16x128xf32>
    %109 = arith.mulf %107, %108 : vector<8x16x128xf32>
    %c0_41 = arith.constant 0 : index
    %c0_42 = arith.constant 0 : index
    %110 = vector.load %arg9[%c0_41, %c0_42] : memref<1x128xf32, #tpu.memory_space<vmem>>, vector<1x128xf32>
    %111 = vector.shape_cast %110 : vector<1x128xf32> to vector<1x1x128xf32>
    %112 = vector.broadcast %111 : vector<1x1x128xf32> to vector<8x16x128xf32>
    %113 = arith.mulf %109, %112 : vector<8x16x128xf32>
    %c0_43 = arith.constant 0 : index
    %c0_44 = arith.constant 0 : index
    %114 = vector.load %arg10[%c0_43, %c0_44] : memref<1x128xf32, #tpu.memory_space<vmem>>, vector<1x128xf32>
    %115 = vector.shape_cast %114 : vector<1x128xf32> to vector<1x1x128xf32>
    %116 = vector.broadcast %115 : vector<1x1x128xf32> to vector<8x16x128xf32>
    %117 = arith.addf %113, %116 : vector<8x16x128xf32>
    %118 = vector.shape_cast %117 : vector<8x16x128xf32> to vector<128x128xf32>
    %cst_45 = arith.constant 0.000000e+00 : f32
    %119 = vector.broadcast %cst_45 : f32 to vector<128x128xf32>
    %120 = arith.maximumf %118, %119 : vector<128x128xf32>
    %c0_46 = arith.constant 0 : index
    %c0_47 = arith.constant 0 : index
    %121 = vector.load %arg11[%c0_46, %c0_47] : memref<128x128xf32, #tpu.memory_space<vmem>>, vector<128x128xf32>
    %cst_48 = arith.constant dense<0.000000e+00> : vector<128x128xf32>
    %122 = tpu.matmul %120, %121, %cst_48 {dimension_numbers = #tpu.dot_dimension_numbers<[1], [0], [0], [1], [0, 0, 1, 1], [], []>} : vector<128x128xf32>, vector<128x128xf32>, vector<128x128xf32> -> vector<128x128xf32>
    %123 = vector.shape_cast %122 : vector<128x128xf32> to vector<8x16x128xf32>
    %c0_49 = arith.constant 0 : index
    %c0_50 = arith.constant 0 : index
    %c0_51 = arith.constant 0 : index
    %124 = vector.load %arg12[%c0_49, %c0_50, %c0_51] : memref<8x16x128xf32, #tpu.memory_space<vmem>>, vector<8x16x128xf32>
    tpu.vector_store %arg12[%c0_49, %c0_50, %c0_51], %123 {strides = array<i32>} : memref<8x16x128xf32, #tpu.memory_space<vmem>>, vector<8x16x128xf32>,
    return
  }
  func.func @transform_0(%arg0: i32) -> (i32, i32, i32) {
    %c0_i32 = arith.constant 0 : i32
    %c0_i32_0 = arith.constant 0 : i32
    %c0_i32_1 = arith.constant 0 : i32
    return %arg0, %c0_i32, %c0_i32_0 : i32, i32, i32
  }
  func.func @transform_1(%arg0: i32) -> (i32, i32, i32, i32) {
    %c0_i32 = arith.constant 0 : i32
    %c0_i32_0 = arith.constant 0 : i32
    %c0_i32_1 = arith.constant 0 : i32
    %c0_i32_2 = arith.constant 0 : i32
    return %c0_i32, %arg0, %c0_i32_0, %c0_i32_1 : i32, i32, i32, i32
  }
  func.func @transform_2(%arg0: i32) -> (i32, i32, i32) {
    %c0_i32 = arith.constant 0 : i32
    %c0_i32_0 = arith.constant 0 : i32
    %c0_i32_1 = arith.constant 0 : i32
    return %c0_i32, %arg0, %c0_i32_0 : i32, i32, i32
  }
  func.func @transform_3(%arg0: i32) -> (i32, i32, i32) {
    %c0_i32 = arith.constant 0 : i32
    %c0_i32_0 = arith.constant 0 : i32
    %c0_i32_1 = arith.constant 0 : i32
    %c0_i32_2 = arith.constant 0 : i32
    return %c0_i32, %c0_i32_0, %c0_i32_1 : i32, i32, i32
  }
  func.func @transform_4(%arg0: i32) -> (i32, i32) {
    %c0_i32 = arith.constant 0 : i32
    %c0_i32_0 = arith.constant 0 : i32
    %c0_i32_1 = arith.constant 0 : i32
    return %c0_i32, %c0_i32_0 : i32, i32
  }
  func.func @transform_5(%arg0: i32) -> (i32, i32) {
    %c0_i32 = arith.constant 0 : i32
    %c0_i32_0 = arith.constant 0 : i32
    %c0_i32_1 = arith.constant 0 : i32
    return %c0_i32, %c0_i32_0 : i32, i32
  }
  func.func @transform_6(%arg0: i32) -> (i32, i32) {
    %c0_i32 = arith.constant 0 : i32
    %c0_i32_0 = arith.constant 0 : i32
    %c0_i32_1 = arith.constant 0 : i32
    return %c0_i32, %c0_i32_0 : i32, i32
  }
  func.func @transform_7(%arg0: i32) -> (i32, i32) {
    %c0_i32 = arith.constant 0 : i32
    %c0_i32_0 = arith.constant 0 : i32
    %c0_i32_1 = arith.constant 0 : i32
    return %c0_i32, %c0_i32_0 : i32, i32
  }
  func.func @transform_8(%arg0: i32) -> (i32, i32) {
    %c0_i32 = arith.constant 0 : i32
    %c0_i32_0 = arith.constant 0 : i32
    %c0_i32_1 = arith.constant 0 : i32
    return %c0_i32, %c0_i32_0 : i32, i32
  }
  func.func @transform_9(%arg0: i32) -> (i32, i32) {
    %c0_i32 = arith.constant 0 : i32
    %c0_i32_0 = arith.constant 0 : i32
    %c0_i32_1 = arith.constant 0 : i32
    return %c0_i32, %c0_i32_0 : i32, i32
  }
  func.func @transform_10(%arg0: i32) -> (i32, i32) {
    %c0_i32 = arith.constant 0 : i32
    %c0_i32_0 = arith.constant 0 : i32
    %c0_i32_1 = arith.constant 0 : i32
    return %c0_i32, %c0_i32_0 : i32, i32
  }
  func.func @transform_11(%arg0: i32) -> (i32, i32, i32) {
    %c0_i32 = arith.constant 0 : i32
    %c0_i32_0 = arith.constant 0 : i32
    %c0_i32_1 = arith.constant 0 : i32
    return %arg0, %c0_i32, %c0_i32_0 : i32, i32, i32
  }
}

</mosaic_0001>

<llo_original>
// kernel: tpu_custom_call.1
$region0: #{tpu_custom_call.1}
  #allocation0 [shape = 'u32[]', space=smem, size = 0x4, offset = 0x4, fixed_abs, tag = 'smem constant byte address 0x4 - core index']
  #allocation1 [shape = 'u32[144,128]{1,0:T(1,128)}', space=vmem, size = 0x12000, scoped, tag = 'internal scratch']
  #allocation14 [shape = 's32[]', space=sflag, size = 0x4, offset = 0, fixed_abs, tag = 'sflag constant byte address 0x0 - dummy sync flag']
  %s0 = inlined_call_operand.hbm [shape: bf16[16,16,128], index: 0, kind: input, shape index: {}]
  %s1 = inlined_call_operand.hbm [shape: bf16[2,16,16,43], index: 1, kind: input, shape index: {}]
  %s2 = inlined_call_operand.hbm [shape: f32[2,16,128], index: 2, kind: input, shape index: {}]
  %s3 = inlined_call_operand.hbm [shape: f32[2,16,128], index: 3, kind: input, shape index: {}]
  %s4 = inlined_call_operand.vmem [shape: f32[1,128], index: 4, kind: input, shape index: {}]
  %s5 = inlined_call_operand.vmem [shape: f32[1,128], index: 5, kind: input, shape index: {}]
  %s6 = inlined_call_operand.hbm [shape: f32[128,128], index: 6, kind: input, shape index: {}]
  %s7 = inlined_call_operand.vmem [shape: bf16[43,128], index: 7, kind: input, shape index: {}]
  %s8 = inlined_call_operand.vmem [shape: f32[1,128], index: 8, kind: input, shape index: {}]
  %s9 = inlined_call_operand.vmem [shape: f32[1,128], index: 9, kind: input, shape index: {}]
  %s10 = inlined_call_operand.hbm [shape: f32[128,128], index: 10, kind: input, shape index: {}]
  %s11 = inlined_call_operand.hbm [shape: f32[16,16,128], index: 11, kind: output, shape index: {}]
  %s12 = sld [smem:[#allocation0]]
  $region101: #{tpu_custom_call.1} parent=0
    _
  %s14 = ssub.s32 1, %s12
  %s15 = scalar_select 0, %s14, %s12
  $region1: #{tpu_custom_call.1} parent=0
    #allocation2 [shape = 'u8[65536]{0}', space=vmem, size = 0x10000, scoped, tag = 'input window, operand 0']
    #allocation3 [shape = 's32[2]{0}', space=sflag, size = 0x8, scoped, tag = 'scoped memory for tpu_custom_call.1']
    #allocation4 [shape = 's32[2]{0}', space=sflag, size = 0x8, scoped, tag = 'scoped memory for tpu_custom_call.1']
    #allocation5 [shape = 'u8[131072]{0}', space=vmem, size = 0x20000, scoped, tag = 'input window, operand 1']
    #allocation6 [shape = 's32[2]{0}', space=sflag, size = 0x8, scoped, tag = 'scoped memory for tpu_custom_call.1']
    #allocation7 [shape = 'u8[16384]{0}', space=vmem, size = 0x4000, scoped, tag = 'input window, operand 2']
    #allocation8 [shape = 'u8[16384]{0}', space=vmem, size = 0x4000, scoped, tag = 'input window, operand 3, single buffered']
    #allocation9 [shape = 's32[1]{0}', space=sflag, size = 0x4, scoped, tag = 'scoped memory for tpu_custom_call.1']
    #allocation10 [shape = 'u8[65536]{0}', space=vmem, size = 0x10000, scoped, tag = 'input window, operand 6, single buffered']
    #allocation11 [shape = 'u8[65536]{0}', space=vmem, size = 0x10000, scoped, tag = 'input window, operand 10, single buffered']
    #allocation12 [shape = 's32[1]{0}', space=sflag, size = 0x4, scoped, tag = 'scoped memory for tpu_custom_call.1']
    #allocation13 [shape = 'u8[131072]{0}', space=vmem, size = 0x20000, scoped, tag = 'output window, operand 0']
    %16 = vsyncpa [#allocation3], 0
    %s17 = scalar_lea.sflag [#allocation3], 1
    %18 = vsyncpa %s17, 0
    %19 = vsyncpa [#allocation6], 0
    %s20 = scalar_lea.sflag [#allocation6], 1
    %21 = vsyncpa %s20, 0
    %22 = vsyncpa [#allocation9], 0
    %23 = vsyncpa [#allocation12], 0
    %24 = vsyncpa [#allocation4], 0
    %s25 = scalar_lea.sflag [#allocation4], 1
    %26 = vsyncpa %s25, 0
    loop: start=0, step=1, limit=4
    $region2: #{tpu_custom_call.1} parent=1 // loop_pre_header
      _
    $region3: #{tpu_custom_call.1} parent=1 // loop_header
      %s28 = sphi 0, %s32
      %p29 = scmp.ge.s32.totalorder %s28, 4
      %s38 = sphi 0, %s40
      %s41 = sphi 0, %s38
      %s42 = sphi 0, %s41
      %s58 = sphi 0, %s42
      %s64 = sphi 0, %s66
      %s67 = sphi 0, %s64
      %s68 = sphi 0, %s67
      %s84 = sphi 0, %s68
      %s90 = sphi 0, %s92
      %s93 = sphi 0, %s90
      %s94 = sphi 0, %s93
      %s110 = sphi 0, %s94
      %s114 = sphi 0, %s114
      %s116 = sphi 0, %s114
      %s117 = sphi 0, %s116
      %s131 = sphi 0, %s117
      %s135 = sphi 0, %s135
      %s137 = sphi 0, %s135
      %s138 = sphi 0, %s137
      %s152 = sphi 0, %s138
      %s156 = sphi 0, %s156
      %s158 = sphi 0, %s156
      %s159 = sphi 0, %s158
      %s173 = sphi 0, %s159
      %s177 = sphi 0, %s177
      %s179 = sphi 0, %s177
      %s180 = sphi 0, %s179
      %s194 = sphi 0, %s180
      %s198 = sphi 0, %s198
      %s200 = sphi 0, %s198
      %s201 = sphi 0, %s200
      %s215 = sphi 0, %s201
      %s219 = sphi 0, %s219
      %s221 = sphi 0, %s219
      %s222 = sphi 0, %s221
      %s236 = sphi 0, %s222
      %s240 = sphi 0, %s240
      %s242 = sphi 0, %s240
      %s243 = sphi 0, %s242
      %s257 = sphi 0, %s243
      %s261 = sphi 0, %s261
      %s263 = sphi 0, %s261
      %s264 = sphi 0, %s263
      %s278 = sphi 0, %s264
      %s284 = sphi 0, %s286
      %s287 = sphi 0, %s284
      %s288 = sphi 0, %s287
      %s304 = sphi 0, %s288
    $region4: #{tpu_custom_call.1} parent=1 // loop_header_branch
      %31 = sbr.rel (%p29) target = $region8
    $region5: #{tpu_custom_call.1} parent=1 // loop_body
      %s33 = ssub.s32 %s28, 1
      %s34 = ssub.s32 %s28, 2
      %s35 = sadd.s32 %s28, 1
      %s36 = ssub.s32 %s28, %s35
      %p37 = scmp.eq.s32.totalorder %s36, 0
      %s39 = sadd.s32 %s38, 1
      %s40 = scalar_select %p37, %s38, %s39
      %p43 = pneg %p37
      %p44 = scmp.eq.s32.totalorder %s28, 1
      %p45 = por %p43, %p44
      %p46 = scmp.ne.s32.totalorder %s38, %s41
      %p47 = scmp.eq.s32.totalorder %s28, 0
      %p48 = por %p46, %p47
      %p49 = scmp.ne.s32.totalorder %s38, %s41
      %p50 = scmp.eq.s32.totalorder %s33, 1
      %p51 = por %p49, %p50
      %p52 = scmp.ne.s32.totalorder %s41, %s42
      %p53 = scmp.eq.s32.totalorder %s33, 0
      %p54 = por %p52, %p53
      %p55 = scmp.ne.s32.totalorder %s41, %s42
      %p56 = scmp.eq.s32.totalorder %s34, 1
      %p57 = por %p55, %p56
      %p59 = scmp.ne.s32.totalorder %s42, %s58
      %p60 = scmp.eq.s32.totalorder %s34, 0
      %p61 = por %p59, %p60
      %s62 = ssub.s32 %s28, %s35
      %p63 = scmp.eq.s32.totalorder %s62, 0
      %s65 = sadd.s32 %s64, 1
      %s66 = scalar_select %p63, %s64, %s65
      %p69 = pneg %p63
      %p70 = scmp.eq.s32.totalorder %s28, 1
      %p71 = por %p69, %p70
      %p72 = scmp.ne.s32.totalorder %s64, %s67
      %p73 = scmp.eq.s32.totalorder %s28, 0
      %p74 = por %p72, %p73
      %p75 = scmp.ne.s32.totalorder %s64, %s67
      %p76 = scmp.eq.s32.totalorder %s33, 1
      %p77 = por %p75, %p76
      %p78 = scmp.ne.s32.totalorder %s67, %s68
      %p79 = scmp.eq.s32.totalorder %s33, 0
      %p80 = por %p78, %p79
      %p81 = scmp.ne.s32.totalorder %s67, %s68
      %p82 = scmp.eq.s32.totalorder %s34, 1
      %p83 = por %p81, %p82
      %p85 = scmp.ne.s32.totalorder %s68, %s84
      %p86 = scmp.eq.s32.totalorder %s34, 0
      %p87 = por %p85, %p86
      %s88 = ssub.s32 %s28, %s35
      %p89 = scmp.eq.s32.totalorder %s88, 0
      %s91 = sadd.s32 %s90, 1
      %s92 = scalar_select %p89, %s90, %s91
      %p95 = pneg %p89
      %p96 = scmp.eq.s32.totalorder %s28, 1
      %p97 = por %p95, %p96
      %p98 = scmp.ne.s32.totalorder %s90, %s93
      %p99 = scmp.eq.s32.totalorder %s28, 0
      %p100 = por %p98, %p99
      %p101 = scmp.ne.s32.totalorder %s90, %s93
      %p102 = scmp.eq.s32.totalorder %s33, 1
      %p103 = por %p101, %p102
      %p104 = scmp.ne.s32.totalorder %s93, %s94
      %p105 = scmp.eq.s32.totalorder %s33, 0
      %p106 = por %p104, %p105
      %p107 = scmp.ne.s32.totalorder %s93, %s94
      %p108 = scmp.eq.s32.totalorder %s34, 1
      %p109 = por %p107, %p108
      %p111 = scmp.ne.s32.totalorder %s94, %s110
      %p112 = scmp.eq.s32.totalorder %s34, 0
      %p113 = por %p111, %p112
      %s115 = sadd.s32 %s114, 1
      %p118 = scmp.eq.s32.totalorder %s28, 1
      %p119 = scmp.ne.s32.totalorder %s114, %s116
      %p120 = scmp.eq.s32.totalorder %s28, 0
      %p121 = por %p119, %p120
      %p122 = scmp.ne.s32.totalorder %s114, %s116
      %p123 = scmp.eq.s32.totalorder %s33, 1
      %p124 = por %p122, %p123
      %p125 = scmp.ne.s32.totalorder %s116, %s117
      %p126 = scmp.eq.s32.totalorder %s33, 0
      %p127 = por %p125, %p126
      %p128 = scmp.ne.s32.totalorder %s116, %s117
      %p129 = scmp.eq.s32.totalorder %s34, 1
      %p130 = por %p128, %p129
      %p132 = scmp.ne.s32.totalorder %s117, %s131
      %p133 = scmp.eq.s32.totalorder %s34, 0
      %p134 = por %p132, %p133
      %s136 = sadd.s32 %s135, 1
      %p139 = scmp.eq.s32.totalorder %s28, 1
      %p140 = scmp.ne.s32.totalorder %s135, %s137
      %p141 = scmp.eq.s32.totalorder %s28, 0
      %p142 = por %p140, %p141
      %p143 = scmp.ne.s32.totalorder %s135, %s137
      %p144 = scmp.eq.s32.totalorder %s33, 1
      %p145 = por %p143, %p144
      %p146 = scmp.ne.s32.totalorder %s137, %s138
      %p147 = scmp.eq.s32.totalorder %s33, 0
      %p148 = por %p146, %p147
      %p149 = scmp.ne.s32.totalorder %s137, %s138
      %p150 = scmp.eq.s32.totalorder %s34, 1
      %p151 = por %p149, %p150
      %p153 = scmp.ne.s32.totalorder %s138, %s152
      %p154 = scmp.eq.s32.totalorder %s34, 0
      %p155 = por %p153, %p154
      %s157 = sadd.s32 %s156, 1
      %p160 = scmp.eq.s32.totalorder %s28, 1
      %p161 = scmp.ne.s32.totalorder %s156, %s158
      %p162 = scmp.eq.s32.totalorder %s28, 0
      %p163 = por %p161, %p162
      %p164 = scmp.ne.s32.totalorder %s156, %s158
      %p165 = scmp.eq.s32.totalorder %s33, 1
      %p166 = por %p164, %p165
      %p167 = scmp.ne.s32.totalorder %s158, %s159
      %p168 = scmp.eq.s32.totalorder %s33, 0
      %p169 = por %p167, %p168
      %p170 = scmp.ne.s32.totalorder %s158, %s159
      %p171 = scmp.eq.s32.totalorder %s34, 1
      %p172 = por %p170, %p171
      %p174 = scmp.ne.s32.totalorder %s159, %s173
      %p175 = scmp.eq.s32.totalorder %s34, 0
      %p176 = por %p174, %p175
      %s178 = sadd.s32 %s177, 1
      %p181 = scmp.eq.s32.totalorder %s28, 1
      %p182 = scmp.ne.s32.totalorder %s177, %s179
      %p183 = scmp.eq.s32.totalorder %s28, 0
      %p184 = por %p182, %p183
      %p185 = scmp.ne.s32.totalorder %s177, %s179
      %p186 = scmp.eq.s32.totalorder %s33, 1
      %p187 = por %p185, %p186
      %p188 = scmp.ne.s32.totalorder %s179, %s180
      %p189 = scmp.eq.s32.totalorder %s33, 0
      %p190 = por %p188, %p189
      %p191 = scmp.ne.s32.totalorder %s179, %s180
      %p192 = scmp.eq.s32.totalorder %s34, 1
      %p193 = por %p191, %p192
      %p195 = scmp.ne.s32.totalorder %s180, %s194
      %p196 = scmp.eq.s32.totalorder %s34, 0
      %p197 = por %p195, %p196
      %s199 = sadd.s32 %s198, 1
      %p202 = scmp.eq.s32.totalorder %s28, 1
      %p203 = scmp.ne.s32.totalorder %s198, %s200
      %p204 = scmp.eq.s32.totalorder %s28, 0
      %p205 = por %p203, %p204
      %p206 = scmp.ne.s32.totalorder %s198, %s200
      %p207 = scmp.eq.s32.totalorder %s33, 1
      %p208 = por %p206, %p207
      %p209 = scmp.ne.s32.totalorder %s200, %s201
      %p210 = scmp.eq.s32.totalorder %s33, 0
      %p211 = por %p209, %p210
      %p212 = scmp.ne.s32.totalorder %s200, %s201
      %p213 = scmp.eq.s32.totalorder %s34, 1
      %p214 = por %p212, %p213
      %p216 = scmp.ne.s32.totalorder %s201, %s215
      %p217 = scmp.eq.s32.totalorder %s34, 0
      %p218 = por %p216, %p217
      %s220 = sadd.s32 %s219, 1
      %p223 = scmp.eq.s32.totalorder %s28, 1
      %p224 = scmp.ne.s32.totalorder %s219, %s221
      %p225 = scmp.eq.s32.totalorder %s28, 0
      %p226 = por %p224, %p225
      %p227 = scmp.ne.s32.totalorder %s219, %s221
      %p228 = scmp.eq.s32.totalorder %s33, 1
      %p229 = por %p227, %p228
      %p230 = scmp.ne.s32.totalorder %s221, %s222
      %p231 = scmp.eq.s32.totalorder %s33, 0
      %p232 = por %p230, %p231
      %p233 = scmp.ne.s32.totalorder %s221, %s222
      %p234 = scmp.eq.s32.totalorder %s34, 1
      %p235 = por %p233, %p234
      %p237 = scmp.ne.s32.totalorder %s222, %s236
      %p238 = scmp.eq.s32.totalorder %s34, 0
      %p239 = por %p237, %p238
      %s241 = sadd.s32 %s240, 1
      %p244 = scmp.eq.s32.totalorder %s28, 1
      %p245 = scmp.ne.s32.totalorder %s240, %s242
      %p246 = scmp.eq.s32.totalorder %s28, 0
      %p247 = por %p245, %p246
      %p248 = scmp.ne.s32.totalorder %s240, %s242
      %p249 = scmp.eq.s32.totalorder %s33, 1
      %p250 = por %p248, %p249
      %p251 = scmp.ne.s32.totalorder %s242, %s243
      %p252 = scmp.eq.s32.totalorder %s33, 0
      %p253 = por %p251, %p252
      %p254 = scmp.ne.s32.totalorder %s242, %s243
      %p255 = scmp.eq.s32.totalorder %s34, 1
      %p256 = por %p254, %p255
      %p258 = scmp.ne.s32.totalorder %s243, %s257
      %p259 = scmp.eq.s32.totalorder %s34, 0
      %p260 = por %p258, %p259
      %s262 = sadd.s32 %s261, 1
      %p265 = scmp.eq.s32.totalorder %s28, 1
      %p266 = scmp.ne.s32.totalorder %s261, %s263
      %p267 = scmp.eq.s32.totalorder %s28, 0
      %p268 = por %p266, %p267
      %p269 = scmp.ne.s32.totalorder %s261, %s263
      %p270 = scmp.eq.s32.totalorder %s33, 1
      %p271 = por %p269, %p270
      %p272 = scmp.ne.s32.totalorder %s263, %s264
      %p273 = scmp.eq.s32.totalorder %s33, 0
      %p274 = por %p272, %p273
      %p275 = scmp.ne.s32.totalorder %s263, %s264
      %p276 = scmp.eq.s32.totalorder %s34, 1
      %p277 = por %p275, %p276
      %p279 = scmp.ne.s32.totalorder %s264, %s278
      %p280 = scmp.eq.s32.totalorder %s34, 0
      %p281 = por %p279, %p280
      %s282 = ssub.s32 %s28, %s35
      %p283 = scmp.eq.s32.totalorder %s282, 0
      %s285 = sadd.s32 %s284, 1
      %s286 = scalar_select %p283, %s284, %s285
      %p289 = pneg %p283
      %p290 = scmp.eq.s32.totalorder %s28, 1
      %p291 = por %p289, %p290
      %p292 = scmp.ne.s32.totalorder %s284, %s287
      %p293 = scmp.eq.s32.totalorder %s28, 0
      %p294 = por %p292, %p293
      %p295 = scmp.ne.s32.totalorder %s284, %s287
      %p296 = scmp.eq.s32.totalorder %s33, 1
      %p297 = por %p295, %p296
      %p298 = scmp.ne.s32.totalorder %s287, %s288
      %p299 = scmp.eq.s32.totalorder %s33, 0
      %p300 = por %p298, %p299
      %p301 = scmp.ne.s32.totalorder %s287, %s288
      %p302 = scmp.eq.s32.totalorder %s34, 1
      %p303 = por %p301, %p302
      %p305 = scmp.ne.s32.totalorder %s288, %s304
      %p306 = scmp.eq.s32.totalorder %s34, 0
      %p307 = por %p305, %p306
      %p308 = scmp.le.s32.totalorder 1, %s28
      %p309 = scmp.lt.s32.totalorder %s28, 3
      %p310 = pnand %p308, %p309
      %p311 = pneg %p310
      // Predicated region
      $region9: #{tpu_custom_call.1} parent=5 // pred_check
        _
      $region10: #{tpu_custom_call.1} parent=5 // pred_check_branch
        %313 = sbr.rel (%p310) target = $region12
      $region11: #{tpu_custom_call.1} parent=5 // pred_region
        %s314 = ssub.s32 %s28, 1
        // Predicated region
        $region13: #{tpu_custom_call.1} parent=11 // pred_check
          %p315 = pneg %p127
        $region14: #{tpu_custom_call.1} parent=11 // pred_check_branch
          %317 = sbr.rel (%p315) target = $region16
        $region15: #{tpu_custom_call.1} parent=11 // pred_region
          %s319 = ssub.s32 512, 512
          %320 = vsyncadd [#allocation9], %s319
          %s321 = sshll.u32 [#allocation8], 4
          %s322 = int_to_ptr.vmem [resolvable:$true] %s321
          %327 = dma.hbm_to_vmem [thread:$0]  %s3, 512, %s322, [#allocation9], 128, 128, 8
        $region16: #{tpu_custom_call.1} parent=11 // pred_fallthru
          _
        // Predicated region
        $region17: #{tpu_custom_call.1} parent=11 // pred_check
          %p328 = pneg %p148
        $region18: #{tpu_custom_call.1} parent=11 // pred_check_branch
          %330 = sbr.rel (%p328) target = $region20
        $region19: #{tpu_custom_call.1} parent=11 // pred_region
          _
        $region20: #{tpu_custom_call.1} parent=11 // pred_fallthru
          _
        // Predicated region
        $region21: #{tpu_custom_call.1} parent=11 // pred_check
          %p331 = pneg %p169
        $region22: #{tpu_custom_call.1} parent=11 // pred_check_branch
          %333 = sbr.rel (%p331) target = $region24
        $region23: #{tpu_custom_call.1} parent=11 // pred_region
          _
        $region24: #{tpu_custom_call.1} parent=11 // pred_fallthru
          _
        // Predicated region
        $region25: #{tpu_custom_call.1} parent=11 // pred_check
          %p334 = pneg %p190
        $region26: #{tpu_custom_call.1} parent=11 // pred_check_branch
          %336 = sbr.rel (%p334) target = $region28
        $region27: #{tpu_custom_call.1} parent=11 // pred_region
          %s338 = ssub.s32 2048, 2048
          %339 = vsyncadd [#allocation9], %s338
          %s340 = sshll.u32 [#allocation10], 4
          %s341 = int_to_ptr.vmem [resolvable:$true] %s340
          %346 = dma.hbm_to_vmem [thread:$0]  %s6, 2048, %s341, [#allocation9], 128, 128, 8
        $region28: #{tpu_custom_call.1} parent=11 // pred_fallthru
          _
        // Predicated region
        $region29: #{tpu_custom_call.1} parent=11 // pred_check
          %p347 = pneg %p211
        $region30: #{tpu_custom_call.1} parent=11 // pred_check_branch
          %349 = sbr.rel (%p347) target = $region32
        $region31: #{tpu_custom_call.1} parent=11 // pred_region
          _
        $region32: #{tpu_custom_call.1} parent=11 // pred_fallthru
          _
        // Predicated region
        $region33: #{tpu_custom_call.1} parent=11 // pred_check
          %p350 = pneg %p232
        $region34: #{tpu_custom_call.1} parent=11 // pred_check_branch
          %352 = sbr.rel (%p350) target = $region36
        $region35: #{tpu_custom_call.1} parent=11 // pred_region
          _
        $region36: #{tpu_custom_call.1} parent=11 // pred_fallthru
          _
        // Predicated region
        $region37: #{tpu_custom_call.1} parent=11 // pred_check
          %p353 = pneg %p253
        $region38: #{tpu_custom_call.1} parent=11 // pred_check_branch
          %355 = sbr.rel (%p353) target = $region40
        $region39: #{tpu_custom_call.1} parent=11 // pred_region
          _
        $region40: #{tpu_custom_call.1} parent=11 // pred_fallthru
          _
        // Predicated region
        $region41: #{tpu_custom_call.1} parent=11 // pred_check
          %p356 = pneg %p274
        $region42: #{tpu_custom_call.1} parent=11 // pred_check_branch
          %358 = sbr.rel (%p356) target = $region44
        $region43: #{tpu_custom_call.1} parent=11 // pred_region
          %s360 = ssub.s32 2048, 2048
          %361 = vsyncadd [#allocation12], %s360
          %s362 = sshll.u32 [#allocation11], 4
          %s363 = int_to_ptr.vmem [resolvable:$true] %s362
          %368 = dma.hbm_to_vmem [thread:$0]  %s10, 2048, %s363, [#allocation12], 128, 128, 8
        $region44: #{tpu_custom_call.1} parent=11 // pred_fallthru
          _
      $region12: #{tpu_custom_call.1} parent=5 // pred_fallthru
        _
      %p369 = scmp.lt.s32.totalorder %s28, 2
      // Predicated region
      $region45: #{tpu_custom_call.1} parent=5 // pred_check
        %p370 = pneg %p369
      $region46: #{tpu_custom_call.1} parent=5 // pred_check_branch
        %372 = sbr.rel (%p370) target = $region48
      $region47: #{tpu_custom_call.1} parent=5 // pred_region
        // Predicated region
        $region49: #{tpu_custom_call.1} parent=47 // pred_check
          %p373 = pneg %p48
        $region50: #{tpu_custom_call.1} parent=47 // pred_check_branch
          %375 = sbr.rel (%p373) target = $region52
        $region51: #{tpu_custom_call.1} parent=47 // pred_region
          %s376 = sand.u32 %s38, 1
          %s377 = scalar_lea.sflag [#allocation3], %s376
          %s378 = sand.u32 %s38, 1
          %s379 = smul.addr %s378, 64
          %s380 = scalar_lea.vmem [#allocation2], %s379
          %s381 = smul.u32 8, %s28
          %s383 = ssub.s32 1024, 1024
          %384 = vsyncadd %s377, %s383
          %s385 = smul.addr %s381, 2
          %s386 = smul.addr %s385, 64
          %s387 = scalar_lea.hbm %s0, %s386
          %s388 = sshll.u32 %s380, 4
          %s389 = int_to_ptr.vmem [resolvable:$true] %s388
          %394 = dma.hbm_to_vmem [thread:$0]  %s387, 1024, %s389, %s377, 64, 64, 4
        $region52: #{tpu_custom_call.1} parent=47 // pred_fallthru
          _
        // Predicated region
        $region53: #{tpu_custom_call.1} parent=47 // pred_check
          %p395 = pneg %p74
        $region54: #{tpu_custom_call.1} parent=47 // pred_check_branch
          %397 = sbr.rel (%p395) target = $region56
        $region55: #{tpu_custom_call.1} parent=47 // pred_region
          #allocation15 [shape = 'u32[6]{0}', space=smem, size = 0x18, scoped, tag = 'DMA stride descriptor']
          %s398 = sand.u32 %s28, 1
          %s399 = scalar_lea.sflag [#allocation6], %s398
          %s400 = sand.u32 %s64, 1
          %s401 = smul.addr %s400, 128
          %s402 = scalar_lea.vmem [#allocation5], %s401
          %s403 = smul.u32 8, %s28
          %s405 = ssub.s32 2048, 2048
          %406 = vsyncadd %s399, %s405
          %s407 = smul.addr %s403, 2
          %s408 = smul.addr %s407, 64
          %s409 = scalar_lea.hbm %s1, %s408
          %s411 = sshll.u32 1, 14
          %s412 = sxor.u32 4294967295, %s411
          %s414 = sld [smem:[#allocation0]]
          %s415 = sadd.s32 2, %s414
          %s417 = sshll.u32 7, 26
          %s418 = sxor.u32 4294967295, %s417
          %s419 = sand.u32 0, %s418
          %s420 = sshll.u32 %s415, 26
          %s421 = sor.u32 %s419, %s420
          %s422 = sshll.u32 %s402, 4
          %s423 = int_to_ptr.vmem [resolvable:$true] %s422
          %429 = sst [smem:[#allocation15]] 2048
          %s430 = scalar_lea.smem [#allocation15], 1
          %431 = sst [smem:[%s430]] 1024
          %s432 = scalar_lea.smem [#allocation15], 2
          %433 = sst [smem:[%s432]] 16
          %s434 = scalar_lea.smem [#allocation15], 3
          %435 = sst [smem:[%s434]] 64
          %s436 = scalar_lea.smem [#allocation15], 4
          %437 = sst [smem:[%s436]] 64
          %s438 = scalar_lea.smem [#allocation15], 5
          %439 = sst [smem:[%s438]] 4
          %441 = dma.general %s409, 2048, %s423, %s399, [#allocation14], [#allocation15], %s421, 0
        $region56: #{tpu_custom_call.1} parent=47 // pred_fallthru
          _
        // Predicated region
        $region57: #{tpu_custom_call.1} parent=47 // pred_check
          %p442 = pneg %p100
        $region58: #{tpu_custom_call.1} parent=47 // pred_check_branch
          %444 = sbr.rel (%p442) target = $region60
        $region59: #{tpu_custom_call.1} parent=47 // pred_region
          %s445 = sand.u32 %s28, 1
          %s446 = scalar_lea.sflag [#allocation6], %s445
          %s447 = sand.u32 %s90, 1
          %s448 = smul.addr %s447, 16
          %s449 = scalar_lea.vmem [#allocation7], %s448
          %s451 = ssub.s32 256, 256
          %452 = vsyncadd %s446, %s451
          %s453 = smul.addr %s28, 128
          %s454 = scalar_lea.hbm %s2, %s453
          %s455 = sshll.u32 %s449, 4
          %s456 = int_to_ptr.vmem [resolvable:$true] %s455
          %461 = dma.hbm_to_vmem [thread:$0]  %s454, 256, %s456, %s446, 256, 128, 8
        $region60: #{tpu_custom_call.1} parent=47 // pred_fallthru
          _
      $region48: #{tpu_custom_call.1} parent=5 // pred_fallthru
        _
      %p462 = scmp.le.s32.totalorder 1, %s28
      %p463 = scmp.lt.s32.totalorder %s28, 3
      %p464 = pnand %p462, %p463
      %p465 = pneg %p464
      // Predicated region
      $region61: #{tpu_custom_call.1} parent=5 // pred_check
        _
      $region62: #{tpu_custom_call.1} parent=5 // pred_check_branch
        %467 = sbr.rel (%p464) target = $region64
      $region63: #{tpu_custom_call.1} parent=5 // pred_region
        %s468 = ssub.s32 %s28, 1
        %s469 = sand.u32 %s41, 1
        %s470 = scalar_lea.sflag [#allocation3], %s469
        %s471 = sand.u32 %s41, 1
        %s472 = smul.addr %s471, 64
        %s473 = scalar_lea.vmem [#allocation2], %s472
        // Predicated region
        $region65: #{tpu_custom_call.1} parent=63 // pred_check
          %p474 = pneg %p54
        $region66: #{tpu_custom_call.1} parent=63 // pred_check_branch
          %476 = sbr.rel (%p474) target = $region68
        $region67: #{tpu_custom_call.1} parent=63 // pred_region
          %477 = dma.done %s470, 1024
        $region68: #{tpu_custom_call.1} parent=63 // pred_fallthru
          _
        %s478 = sand.u32 %s33, 1
        %s479 = scalar_lea.sflag [#allocation6], %s478
        %s480 = sand.u32 %s67, 1
        %s481 = smul.addr %s480, 128
        %s482 = scalar_lea.vmem [#allocation5], %s481
        // Predicated region
        $region69: #{tpu_custom_call.1} parent=63 // pred_check
          %p483 = pneg %p80
        $region70: #{tpu_custom_call.1} parent=63 // pred_check_branch
          %485 = sbr.rel (%p483) target = $region72
        $region71: #{tpu_custom_call.1} parent=63 // pred_region
          %486 = dma.done %s479, 2048
        $region72: #{tpu_custom_call.1} parent=63 // pred_fallthru
          _
        %s487 = sand.u32 %s33, 1
        %s488 = scalar_lea.sflag [#allocation6], %s487
        %s489 = sand.u32 %s93, 1
        %s490 = smul.addr %s489, 16
        %s491 = scalar_lea.vmem [#allocation7], %s490
        // Predicated region
        $region73: #{tpu_custom_call.1} parent=63 // pred_check
          %p492 = pneg %p106
        $region74: #{tpu_custom_call.1} parent=63 // pred_check_branch
          %494 = sbr.rel (%p492) target = $region76
        $region75: #{tpu_custom_call.1} parent=63 // pred_region
          %495 = dma.done %s488, 256
        $region76: #{tpu_custom_call.1} parent=63 // pred_fallthru
          _
        // Predicated region
        $region77: #{tpu_custom_call.1} parent=63 // pred_check
          %p496 = pneg %p127
        $region78: #{tpu_custom_call.1} parent=63 // pred_check_branch
          %498 = sbr.rel (%p496) target = $region80
        $region79: #{tpu_custom_call.1} parent=63 // pred_region
          %499 = dma.done [#allocation9], 512
        $region80: #{tpu_custom_call.1} parent=63 // pred_fallthru
          _
        // Predicated region
        $region81: #{tpu_custom_call.1} parent=63 // pred_check
          %p500 = pneg %p190
        $region82: #{tpu_custom_call.1} parent=63 // pred_check_branch
          %502 = sbr.rel (%p500) target = $region84
        $region83: #{tpu_custom_call.1} parent=63 // pred_region
          %503 = dma.done [#allocation9], 2048
        $region84: #{tpu_custom_call.1} parent=63 // pred_fallthru
          _
        // Predicated region
        $region85: #{tpu_custom_call.1} parent=63 // pred_check
          %p504 = pneg %p274
        $region86: #{tpu_custom_call.1} parent=63 // pred_check_branch
          %506 = sbr.rel (%p504) target = $region88
        $region87: #{tpu_custom_call.1} parent=63 // pred_region
          %507 = dma.done [#allocation12], 2048
        $region88: #{tpu_custom_call.1} parent=63 // pred_fallthru
          _
        %s508 = sand.u32 %s41, 1
        %s509 = scalar_lea.sflag [#allocation3], %s508
        %s510 = sand.u32 %s41, 1
        %s511 = smul.addr %s510, 64
        %s512 = scalar_lea.vmem [#allocation2], %s511
        %p513 = pneg %p54
        %p514 = pneg %p51
        %s515 = sand.u32 %s33, 1
        %s516 = scalar_lea.sflag [#allocation6], %s515
        %s517 = sand.u32 %s67, 1
        %s518 = smul.addr %s517, 128
        %s519 = scalar_lea.vmem [#allocation5], %s518
        %p520 = pneg %p80
        %p521 = pneg %p77
        %s522 = sand.u32 %s33, 1
        %s523 = scalar_lea.sflag [#allocation6], %s522
        %s524 = sand.u32 %s93, 1
        %s525 = smul.addr %s524, 16
        %s526 = scalar_lea.vmem [#allocation7], %s525
        %p527 = pneg %p106
        %p528 = pneg %p103
        %p529 = pneg %p127
        %p530 = pneg %p124
        %p531 = pneg %p148
        %p532 = pneg %p145
        %p533 = pneg %p169
        %p534 = pneg %p166
        %p535 = pneg %p190
        %p536 = pneg %p187
        %p537 = pneg %p211
        %p538 = pneg %p208
        %p539 = pneg %p232
        %p540 = pneg %p229
        %p541 = pneg %p253
        %p542 = pneg %p250
        %p543 = pneg %p274
        %p544 = pneg %p271
        %p545 = pneg %p300
        %p546 = pneg %p297
        %s547 = sand.u32 %s287, 1
        %s548 = scalar_lea.sflag [#allocation4], %s547
        %s549 = sand.u32 %s287, 1
        %s550 = smul.addr %s549, 128
        %s551 = scalar_lea.vmem [#allocation13], %s550
        %s552 = smul.u32 8, %s33
        %s553 = smul.u32 8, %s33
        %s554 = smul.u32 8, %s33
        %v556 = vld [vmem:[%s473] sm:$0xf]
        %v557 = vld [vmem:[%s473 + $0x4] sm:$0xf]
        %v558 = vld [vmem:[%s473 + $0x8] sm:$0xf]
        %v559 = vld [vmem:[%s473 + $0xc] sm:$0xf]
        %v560 = vld [vmem:[%s473 + $0x10] sm:$0xf]
        %v561 = vld [vmem:[%s473 + $0x14] sm:$0xf]
        %v562 = vld [vmem:[%s473 + $0x18] sm:$0xf]
        %v563 = vld [vmem:[%s473 + $0x1c] sm:$0xf]
        %v564 = vld [vmem:[%s473 + $0x20] sm:$0xf]
        %v565 = vld [vmem:[%s473 + $0x24] sm:$0xf]
        %v566 = vld [vmem:[%s473 + $0x28] sm:$0xf]
        %v567 = vld [vmem:[%s473 + $0x2c] sm:$0xf]
        %v568 = vld [vmem:[%s473 + $0x30] sm:$0xf]
        %v569 = vld [vmem:[%s473 + $0x34] sm:$0xf]
        %v570 = vld [vmem:[%s473 + $0x38] sm:$0xf]
        %v571 = vld [vmem:[%s473 + $0x3c] sm:$0xf]
        %v572 = vunpack.c.l.bf16 %v556
        %v573 = vunpack.c.l.bf16 %v557
        %v574 = vunpack.c.l.bf16 %v558
        %v575 = vunpack.c.l.bf16 %v559
        %v576 = vunpack.c.l.bf16 %v560
        %v577 = vunpack.c.l.bf16 %v561
        %v578 = vunpack.c.l.bf16 %v562
        %v579 = vunpack.c.l.bf16 %v563
        %v580 = vunpack.c.l.bf16 %v564
        %v581 = vunpack.c.l.bf16 %v565
        %v582 = vunpack.c.l.bf16 %v566
        %v583 = vunpack.c.l.bf16 %v567
        %v584 = vunpack.c.l.bf16 %v568
        %v585 = vunpack.c.l.bf16 %v569
        %v586 = vunpack.c.l.bf16 %v570
        %v587 = vunpack.c.l.bf16 %v571
        %588 = vadd.xlane.f32.xlu0 %v572
        %v589 = vpop.xlane.xlu0 %588
        %590 = vadd.xlane.f32.xlu0 %v573
        %v591 = vpop.xlane.xlu0 %590
        %592 = vadd.xlane.f32.xlu0 %v574
        %v593 = vpop.xlane.xlu0 %592
        %594 = vadd.xlane.f32.xlu0 %v575
        %v595 = vpop.xlane.xlu0 %594
        %596 = vadd.xlane.f32.xlu0 %v576
        %v597 = vpop.xlane.xlu0 %596
        %598 = vadd.xlane.f32.xlu0 %v577
        %v599 = vpop.xlane.xlu0 %598
        %600 = vadd.xlane.f32.xlu0 %v578
        %v601 = vpop.xlane.xlu0 %600
        %602 = vadd.xlane.f32.xlu0 %v579
        %v603 = vpop.xlane.xlu0 %602
        %604 = vadd.xlane.f32.xlu0 %v580
        %v605 = vpop.xlane.xlu0 %604
        %606 = vadd.xlane.f32.xlu0 %v581
        %v607 = vpop.xlane.xlu0 %606
        %608 = vadd.xlane.f32.xlu0 %v582
        %v609 = vpop.xlane.xlu0 %608
        %610 = vadd.xlane.f32.xlu0 %v583
        %v611 = vpop.xlane.xlu0 %610
        %612 = vadd.xlane.f32.xlu0 %v584
        %v613 = vpop.xlane.xlu0 %612
        %614 = vadd.xlane.f32.xlu0 %v585
        %v615 = vpop.xlane.xlu0 %614
        %616 = vadd.xlane.f32.xlu0 %v586
        %v617 = vpop.xlane.xlu0 %616
        %618 = vadd.xlane.f32.xlu0 %v587
        %v619 = vpop.xlane.xlu0 %618
        %v620 = vrcp.pop 128.0
        %v621 = vmul.f32 %v589, %v620
        %v622 = vmul.f32 %v591, %v620
        %v623 = vmul.f32 %v593, %v620
        %v624 = vmul.f32 %v595, %v620
        %v625 = vmul.f32 %v597, %v620
        %v626 = vmul.f32 %v599, %v620
        %v627 = vmul.f32 %v601, %v620
        %v628 = vmul.f32 %v603, %v620
        %v629 = vmul.f32 %v605, %v620
        %v630 = vmul.f32 %v607, %v620
        %v631 = vmul.f32 %v609, %v620
        %v632 = vmul.f32 %v611, %v620
        %v633 = vmul.f32 %v613, %v620
        %v634 = vmul.f32 %v615, %v620
        %v635 = vmul.f32 %v617, %v620
        %v636 = vmul.f32 %v619, %v620
        %v637 = vmul.f32 %v572, %v572
        %v638 = vmul.f32 %v573, %v573
        %v639 = vmul.f32 %v574, %v574
        %v640 = vmul.f32 %v575, %v575
        %v641 = vmul.f32 %v576, %v576
        %v642 = vmul.f32 %v577, %v577
        %v643 = vmul.f32 %v578, %v578
        %v644 = vmul.f32 %v579, %v579
        %v645 = vmul.f32 %v580, %v580
        %v646 = vmul.f32 %v581, %v581
        %v647 = vmul.f32 %v582, %v582
        %v648 = vmul.f32 %v583, %v583
        %v649 = vmul.f32 %v584, %v584
        %v650 = vmul.f32 %v585, %v585
        %v651 = vmul.f32 %v586, %v586
        %v652 = vmul.f32 %v587, %v587
        %653 = vadd.xlane.f32.xlu0 %v637
        %v654 = vpop.xlane.xlu0 %653
        %655 = vadd.xlane.f32.xlu0 %v638
        %v656 = vpop.xlane.xlu0 %655
        %657 = vadd.xlane.f32.xlu0 %v639
        %v658 = vpop.xlane.xlu0 %657
        %659 = vadd.xlane.f32.xlu0 %v640
        %v660 = vpop.xlane.xlu0 %659
        %661 = vadd.xlane.f32.xlu0 %v641
        %v662 = vpop.xlane.xlu0 %661
        %663 = vadd.xlane.f32.xlu0 %v642
        %v664 = vpop.xlane.xlu0 %663
        %665 = vadd.xlane.f32.xlu0 %v643
        %v666 = vpop.xlane.xlu0 %665
        %667 = vadd.xlane.f32.xlu0 %v644
        %v668 = vpop.xlane.xlu0 %667
        %669 = vadd.xlane.f32.xlu0 %v645
        %v670 = vpop.xlane.xlu0 %669
        %671 = vadd.xlane.f32.xlu0 %v646
        %v672 = vpop.xlane.xlu0 %671
        %673 = vadd.xlane.f32.xlu0 %v647
        %v674 = vpop.xlane.xlu0 %673
        %675 = vadd.xlane.f32.xlu0 %v648
        %v676 = vpop.xlane.xlu0 %675
        %677 = vadd.xlane.f32.xlu0 %v649
        %v678 = vpop.xlane.xlu0 %677
        %679 = vadd.xlane.f32.xlu0 %v650
        %v680 = vpop.xlane.xlu0 %679
        %681 = vadd.xlane.f32.xlu0 %v651
        %v682 = vpop.xlane.xlu0 %681
        %683 = vadd.xlane.f32.xlu0 %v652
        %v684 = vpop.xlane.xlu0 %683
        %v685 = vmul.f32 %v654, %v620
        %v686 = vmul.f32 %v656, %v620
        %v687 = vmul.f32 %v658, %v620
        %v688 = vmul.f32 %v660, %v620
        %v689 = vmul.f32 %v662, %v620
        %v690 = vmul.f32 %v664, %v620
        %v691 = vmul.f32 %v666, %v620
        %v692 = vmul.f32 %v668, %v620
        %v693 = vmul.f32 %v670, %v620
        %v694 = vmul.f32 %v672, %v620
        %v695 = vmul.f32 %v674, %v620
        %v696 = vmul.f32 %v676, %v620
        %v697 = vmul.f32 %v678, %v620
        %v698 = vmul.f32 %v680, %v620
        %v699 = vmul.f32 %v682, %v620
        %v700 = vmul.f32 %v684, %v620
        %v701 = vmul.f32 %v621, %v621
        %v702 = vmul.f32 %v622, %v622
        %v703 = vmul.f32 %v623, %v623
        %v704 = vmul.f32 %v624, %v624
        %v705 = vmul.f32 %v625, %v625
        %v706 = vmul.f32 %v626, %v626
        %v707 = vmul.f32 %v627, %v627
        %v708 = vmul.f32 %v628, %v628
        %v709 = vmul.f32 %v629, %v629
        %v710 = vmul.f32 %v630, %v630
        %v711 = vmul.f32 %v631, %v631
        %v712 = vmul.f32 %v632, %v632
        %v713 = vmul.f32 %v633, %v633
        %v714 = vmul.f32 %v634, %v634
        %v715 = vmul.f32 %v635, %v635
        %v716 = vmul.f32 %v636, %v636
        %v717 = vsub.f32 %v685, %v701
        %v718 = vsub.f32 %v686, %v702
        %v719 = vsub.f32 %v687, %v703
        %v720 = vsub.f32 %v688, %v704
        %v721 = vsub.f32 %v689, %v705
        %v722 = vsub.f32 %v690, %v706
        %v723 = vsub.f32 %v691, %v707
        %v724 = vsub.f32 %v692, %v708
        %v725 = vsub.f32 %v693, %v709
        %v726 = vsub.f32 %v694, %v710
        %v727 = vsub.f32 %v695, %v711
        %v728 = vsub.f32 %v696, %v712
        %v729 = vsub.f32 %v697, %v713
        %v730 = vsub.f32 %v698, %v714
        %v731 = vsub.f32 %v699, %v715
        %v732 = vsub.f32 %v700, %v716
        %v733 = vmax.f32 %v717, 0.0
        %v734 = vmax.f32 %v718, 0.0
        %v735 = vmax.f32 %v719, 0.0
        %v736 = vmax.f32 %v720, 0.0
        %v737 = vmax.f32 %v721, 0.0
        %v738 = vmax.f32 %v722, 0.0
        %v739 = vmax.f32 %v723, 0.0
        %v740 = vmax.f32 %v724, 0.0
        %v741 = vmax.f32 %v725, 0.0
        %v742 = vmax.f32 %v726, 0.0
        %v743 = vmax.f32 %v727, 0.0
        %v744 = vmax.f32 %v728, 0.0
        %v745 = vmax.f32 %v729, 0.0
        %v746 = vmax.f32 %v730, 0.0
        %v747 = vmax.f32 %v731, 0.0
        %v748 = vmax.f32 %v732, 0.0
        %v749 = vsub.f32 %v572, %v621
        %v750 = vsub.f32 %v573, %v622
        %v751 = vsub.f32 %v574, %v623
        %v752 = vsub.f32 %v575, %v624
        %v753 = vsub.f32 %v576, %v625
        %v754 = vsub.f32 %v577, %v626
        %v755 = vsub.f32 %v578, %v627
        %v756 = vsub.f32 %v579, %v628
        %v757 = vsub.f32 %v580, %v629
        %v758 = vsub.f32 %v581, %v630
        %v759 = vsub.f32 %v582, %v631
        %v760 = vsub.f32 %v583, %v632
        %v761 = vsub.f32 %v584, %v633
        %v762 = vsub.f32 %v585, %v634
        %v763 = vsub.f32 %v586, %v635
        %v764 = vsub.f32 %v587, %v636
        %v765 = vadd.f32 %v733, 1e-05
        %v766 = vadd.f32 %v734, 1e-05
        %v767 = vadd.f32 %v735, 1e-05
        %v768 = vadd.f32 %v736, 1e-05
        %v769 = vadd.f32 %v737, 1e-05
        %v770 = vadd.f32 %v738, 1e-05
        %v771 = vadd.f32 %v739, 1e-05
        %v772 = vadd.f32 %v740, 1e-05
        %v773 = vadd.f32 %v741, 1e-05
        %v774 = vadd.f32 %v742, 1e-05
        %v775 = vadd.f32 %v743, 1e-05
        %v776 = vadd.f32 %v744, 1e-05
        %v777 = vadd.f32 %v745, 1e-05
        %v778 = vadd.f32 %v746, 1e-05
        %v779 = vadd.f32 %v747, 1e-05
        %v780 = vadd.f32 %v748, 1e-05
        %v781 = vrsqrt.pop %v765
        %v782 = vrsqrt.pop %v766
        %v783 = vrsqrt.pop %v767
        %v784 = vrsqrt.pop %v768
        %v785 = vrsqrt.pop %v769
        %v786 = vrsqrt.pop %v770
        %v787 = vrsqrt.pop %v771
        %v788 = vrsqrt.pop %v772
        %v789 = vrsqrt.pop %v773
        %v790 = vrsqrt.pop %v774
        %v791 = vrsqrt.pop %v775
        %v792 = vrsqrt.pop %v776
        %v793 = vrsqrt.pop %v777
        %v794 = vrsqrt.pop %v778
        %v795 = vrsqrt.pop %v779
        %v796 = vrsqrt.pop %v780
        %v797 = vmul.f32 %v749, %v781
        %v798 = vmul.f32 %v750, %v782
        %v799 = vmul.f32 %v751, %v783
        %v800 = vmul.f32 %v752, %v784
        %v801 = vmul.f32 %v753, %v785
        %v802 = vmul.f32 %v754, %v786
        %v803 = vmul.f32 %v755, %v787
        %v804 = vmul.f32 %v756, %v788
        %v805 = vmul.f32 %v757, %v789
        %v806 = vmul.f32 %v758, %v790
        %v807 = vmul.f32 %v759, %v791
        %v808 = vmul.f32 %v760, %v792
        %v809 = vmul.f32 %v761, %v793
        %v810 = vmul.f32 %v762, %v794
        %v811 = vmul.f32 %v763, %v795
        %v812 = vmul.f32 %v764, %v796
        %v813 = vld [vmem:[%s4] sm:$0x1]
        %v815 = vlaneseq
        %v816 = vshrl.u32 %v815, 7
        %v817 = vsub.s32 0, %v816
        %v818 = vrot.slane %v813, %v817
        %v820 = vmul.f32 %v797, %v818
        %v821 = vmul.f32 %v798, %v818
        %v822 = vmul.f32 %v799, %v818
        %v823 = vmul.f32 %v800, %v818
        %v824 = vmul.f32 %v801, %v818
        %v825 = vmul.f32 %v802, %v818
        %v826 = vmul.f32 %v803, %v818
        %v827 = vmul.f32 %v804, %v818
        %v828 = vmul.f32 %v805, %v818
        %v829 = vmul.f32 %v806, %v818
        %v830 = vmul.f32 %v807, %v818
        %v831 = vmul.f32 %v808, %v818
        %v832 = vmul.f32 %v809, %v818
        %v833 = vmul.f32 %v810, %v818
        %v834 = vmul.f32 %v811, %v818
        %v835 = vmul.f32 %v812, %v818
        %v836 = vld [vmem:[%s5] sm:$0x1]
        %v838 = vlaneseq
        %v839 = vshrl.u32 %v838, 7
        %v840 = vsub.s32 0, %v839
        %v841 = vrot.slane %v836, %v840
        %v843 = vadd.f32 %v820, %v841
        %v844 = vadd.f32 %v821, %v841
        %v845 = vadd.f32 %v822, %v841
        %v846 = vadd.f32 %v823, %v841
        %v847 = vadd.f32 %v824, %v841
        %v848 = vadd.f32 %v825, %v841
        %v849 = vadd.f32 %v826, %v841
        %v850 = vadd.f32 %v827, %v841
        %v851 = vadd.f32 %v828, %v841
        %v852 = vadd.f32 %v829, %v841
        %v853 = vadd.f32 %v830, %v841
        %v854 = vadd.f32 %v831, %v841
        %v855 = vadd.f32 %v832, %v841
        %v856 = vadd.f32 %v833, %v841
        %v857 = vadd.f32 %v834, %v841
        %v858 = vadd.f32 %v835, %v841
        %v859 = vld [vmem:[#allocation10] sm:$0xff]
        %v860 = vld [vmem:[#allocation10 + $0x8] sm:$0xff]
        %v861 = vld [vmem:[#allocation10 + $0x10] sm:$0xff]
        %v862 = vld [vmem:[#allocation10 + $0x18] sm:$0xff]
        %v863 = vld [vmem:[#allocation10 + $0x20] sm:$0xff]
        %v864 = vld [vmem:[#allocation10 + $0x28] sm:$0xff]
        %v865 = vld [vmem:[#allocation10 + $0x30] sm:$0xff]
        %v866 = vld [vmem:[#allocation10 + $0x38] sm:$0xff]
        %v867 = vld [vmem:[#allocation10 + $0x40] sm:$0xff]
        %v868 = vld [vmem:[#allocation10 + $0x48] sm:$0xff]
        %v869 = vld [vmem:[#allocation10 + $0x50] sm:$0xff]
        %v870 = vld [vmem:[#allocation10 + $0x58] sm:$0xff]
        %v871 = vld [vmem:[#allocation10 + $0x60] sm:$0xff]
        %v872 = vld [vmem:[#allocation10 + $0x68] sm:$0xff]
        %v873 = vld [vmem:[#allocation10 + $0x70] sm:$0xff]
        %v874 = vld [vmem:[#allocation10 + $0x78] sm:$0xff]
        %875 = vmatprep.subr.mxu0 0.0
        %876 = vmatpush1.msra.mxu0 %v859
        %877 = vmatprep.subr.mxu0 0.0
        %878 = vmatpush1.msra.mxu0 %v860
        %879 = vmatprep.subr.mxu0 0.0
        %880 = vmatpush1.msra.mxu0 %v861
        %881 = vmatprep.subr.mxu0 0.0
        %882 = vmatpush1.msra.mxu0 %v862
        %883 = vmatprep.subr.mxu0 0.0
        %884 = vmatpush1.msra.mxu0 %v863
        %885 = vmatprep.subr.mxu0 0.0
        %886 = vmatpush1.msra.mxu0 %v864
        %887 = vmatprep.subr.mxu0 0.0
        %888 = vmatpush1.msra.mxu0 %v865
        %889 = vmatprep.subr.mxu0 0.0
        %890 = vmatpush1.msra.mxu0 %v866
        %891 = vmatprep.subr.mxu0 0.0
        %892 = vmatpush1.msra.mxu0 %v867
        %893 = vmatprep.subr.mxu0 0.0
        %894 = vmatpush1.msra.mxu0 %v868
        %895 = vmatprep.subr.mxu0 0.0
        %896 = vmatpush1.msra.mxu0 %v869
        %897 = vmatprep.subr.mxu0 0.0
        %898 = vmatpush1.msra.mxu0 %v870
        %899 = vmatprep.subr.mxu0 0.0
        %900 = vmatpush1.msra.mxu0 %v871
        %901 = vmatprep.subr.mxu0 0.0
        %902 = vmatpush1.msra.mxu0 %v872
        %903 = vmatprep.subr.mxu0 0.0
        %904 = vmatpush1.msra.mxu0 %v873
        %905 = vmatprep.subr.mxu0 0.0
        %906 = vmatpush1.msra.mxu0 %v874
        %907 = vmatprep.subr.mxu0 0.0
        %908 = vmatpush1.msra.mxu0 0.0
        %909 = vmatprep.subr.mxu0 0.0
        %910 = vmatpush1.msra.mxu0 0.0
        %911 = vmatprep.subr.mxu0 0.0
        %912 = vmatpush1.msra.mxu0 0.0
        %913 = vmatprep.subr.mxu0 0.0
        %914 = vmatpush1.msra.mxu0 0.0
        %915 = vmatprep.subr.mxu0 0.0
        %916 = vmatpush1.msra.mxu0 0.0
        %917 = vmatprep.subr.mxu0 0.0
        %918 = vmatpush1.msra.mxu0 0.0
        %919 = vmatprep.subr.mxu0 0.0
        %920 = vmatpush1.msra.mxu0 0.0
        %921 = vmatprep.subr.mxu0 0.0
        %922 = vmatpush1.msra.mxu0 0.0
        %923 = vmatprep.subr.mxu0 0.0
        %924 = vmatpush1.msra.mxu0 0.0
        %925 = vmatprep.subr.mxu0 0.0
        %926 = vmatpush1.msra.mxu0 0.0
        %927 = vmatprep.subr.mxu0 0.0
        %928 = vmatpush1.msra.mxu0 0.0
        %929 = vmatprep.subr.mxu0 0.0
        %930 = vmatpush1.msra.mxu0 0.0
        %931 = vmatprep.subr.mxu0 0.0
        %932 = vmatpush1.msra.mxu0 0.0
        %933 = vmatprep.subr.mxu0 0.0
        %934 = vmatpush1.msra.mxu0 0.0
        %935 = vmatprep.subr.mxu0 0.0
        %936 = vmatpush1.msra.mxu0 0.0
        %937 = vmatprep.subr.mxu0 0.0
        %938 = vmatpush1.msra.mxu0 0.0
        %939 = vmatprep.mubr.f32.mxu0 0.0
        %940 = vmatmul.mubr.f32.gmra.mrb[0].mxu0 %v843
        %v941 = vpop.f32.mrb[0].mxu0
        %v942 = vadd.f32 0.0, %v941
        %v943 = vpop.f32.mrb[0].mxu0
        %944 = vmatprep.mubr.f32.mxu0 0.0
        %945 = vmatmul.mubr.f32.gmra.mrb[0].mxu0 %v844
        %v946 = vpop.f32.mrb[0].mxu0
        %v947 = vadd.f32 0.0, %v946
        %v948 = vpop.f32.mrb[0].mxu0
        %949 = vmatprep.mubr.f32.mxu0 0.0
        %950 = vmatmul.mubr.f32.gmra.mrb[0].mxu0 %v845
        %v951 = vpop.f32.mrb[0].mxu0
        %v952 = vadd.f32 0.0, %v951
        %v953 = vpop.f32.mrb[0].mxu0
        %954 = vmatprep.mubr.f32.mxu0 0.0
        %955 = vmatmul.mubr.f32.gmra.mrb[0].mxu0 %v846
        %v956 = vpop.f32.mrb[0].mxu0
        %v957 = vadd.f32 0.0, %v956
        %v958 = vpop.f32.mrb[0].mxu0
        %959 = vmatprep.mubr.f32.mxu0 0.0
        %960 = vmatmul.mubr.f32.gmra.mrb[0].mxu0 %v847
        %v961 = vpop.f32.mrb[0].mxu0
        %v962 = vadd.f32 0.0, %v961
        %v963 = vpop.f32.mrb[0].mxu0
        %964 = vmatprep.mubr.f32.mxu0 0.0
        %965 = vmatmul.mubr.f32.gmra.mrb[0].mxu0 %v848
        %v966 = vpop.f32.mrb[0].mxu0
        %v967 = vadd.f32 0.0, %v966
        %v968 = vpop.f32.mrb[0].mxu0
        %969 = vmatprep.mubr.f32.mxu0 0.0
        %970 = vmatmul.mubr.f32.gmra.mrb[0].mxu0 %v849
        %v971 = vpop.f32.mrb[0].mxu0
        %v972 = vadd.f32 0.0, %v971
        %v973 = vpop.f32.mrb[0].mxu0
        %974 = vmatprep.mubr.f32.mxu0 0.0
        %975 = vmatmul.mubr.f32.gmra.mrb[0].mxu0 %v850
        %v976 = vpop.f32.mrb[0].mxu0
        %v977 = vadd.f32 0.0, %v976
        %v978 = vpop.f32.mrb[0].mxu0
        %979 = vmatprep.mubr.f32.mxu0 0.0
        %980 = vmatmul.mubr.f32.gmra.mrb[0].mxu0 %v851
        %v981 = vpop.f32.mrb[0].mxu0
        %v982 = vadd.f32 0.0, %v981
        %v983 = vpop.f32.mrb[0].mxu0
        %984 = vmatprep.mubr.f32.mxu0 0.0
        %985 = vmatmul.mubr.f32.gmra.mrb[0].mxu0 %v852
        %v986 = vpop.f32.mrb[0].mxu0
        %v987 = vadd.f32 0.0, %v986
        %v988 = vpop.f32.mrb[0].mxu0
        %989 = vmatprep.mubr.f32.mxu0 0.0
        %990 = vmatmul.mubr.f32.gmra.mrb[0].mxu0 %v853
        %v991 = vpop.f32.mrb[0].mxu0
        %v992 = vadd.f32 0.0, %v991
        %v993 = vpop.f32.mrb[0].mxu0
        %994 = vmatprep.mubr.f32.mxu0 0.0
        %995 = vmatmul.mubr.f32.gmra.mrb[0].mxu0 %v854
        %v996 = vpop.f32.mrb[0].mxu0
        %v997 = vadd.f32 0.0, %v996
        %v998 = vpop.f32.mrb[0].mxu0
        %999 = vmatprep.mubr.f32.mxu0 0.0
        %1000 = vmatmul.mubr.f32.gmra.mrb[0].mxu0 %v855
        %v1001 = vpop.f32.mrb[0].mxu0
        %v1002 = vadd.f32 0.0, %v1001
        %v1003 = vpop.f32.mrb[0].mxu0
        %1004 = vmatprep.mubr.f32.mxu0 0.0
        %1005 = vmatmul.mubr.f32.gmra.mrb[0].mxu0 %v856
        %v1006 = vpop.f32.mrb[0].mxu0
        %v1007 = vadd.f32 0.0, %v1006
        %v1008 = vpop.f32.mrb[0].mxu0
        %1009 = vmatprep.mubr.f32.mxu0 0.0
        %1010 = vmatmul.mubr.f32.gmra.mrb[0].mxu0 %v857
        %v1011 = vpop.f32.mrb[0].mxu0
        %v1012 = vadd.f32 0.0, %v1011
        %v1013 = vpop.f32.mrb[0].mxu0
        %1014 = vmatprep.mubr.f32.mxu0 0.0
        %1015 = vmatmul.mubr.f32.gmra.mrb[0].mxu0 %v858
        %v1016 = vpop.f32.mrb[0].mxu0
        %v1017 = vadd.f32 0.0, %v1016
        %v1018 = vpop.f32.mrb[0].mxu0
        %1019 = vdwg.mxu0
        %v1020 = vld [vmem:[%s482] sm:$0xf]
        %v1021 = vld [vmem:[%s482 + $0x4] sm:$0xf]
        %v1022 = vld [vmem:[%s482 + $0x8] sm:$0xf]
        %v1023 = vld [vmem:[%s482 + $0xc] sm:$0xf]
        %v1024 = vld [vmem:[%s482 + $0x10] sm:$0xf]
        %v1025 = vld [vmem:[%s482 + $0x14] sm:$0xf]
        %v1026 = vld [vmem:[%s482 + $0x18] sm:$0xf]
        %v1027 = vld [vmem:[%s482 + $0x1c] sm:$0xf]
        %v1028 = vld [vmem:[%s482 + $0x20] sm:$0xf]
        %v1029 = vld [vmem:[%s482 + $0x24] sm:$0xf]
        %v1030 = vld [vmem:[%s482 + $0x28] sm:$0xf]
        %v1031 = vld [vmem:[%s482 + $0x2c] sm:$0xf]
        %v1032 = vld [vmem:[%s482 + $0x30] sm:$0xf]
        %v1033 = vld [vmem:[%s482 + $0x34] sm:$0xf]
        %v1034 = vld [vmem:[%s482 + $0x38] sm:$0xf]
        %v1035 = vld [vmem:[%s482 + $0x3c] sm:$0xf]
        %v1036 = vld [vmem:[%s482 + $0x40] sm:$0xf]
        %v1037 = vld [vmem:[%s482 + $0x44] sm:$0xf]
        %v1038 = vld [vmem:[%s482 + $0x48] sm:$0xf]
        %v1039 = vld [vmem:[%s482 + $0x4c] sm:$0xf]
        %v1040 = vld [vmem:[%s482 + $0x50] sm:$0xf]
        %v1041 = vld [vmem:[%s482 + $0x54] sm:$0xf]
        %v1042 = vld [vmem:[%s482 + $0x58] sm:$0xf]
        %v1043 = vld [vmem:[%s482 + $0x5c] sm:$0xf]
        %v1044 = vld [vmem:[%s482 + $0x60] sm:$0xf]
        %v1045 = vld [vmem:[%s482 + $0x64] sm:$0xf]
        %v1046 = vld [vmem:[%s482 + $0x68] sm:$0xf]
        %v1047 = vld [vmem:[%s482 + $0x6c] sm:$0xf]
        %v1048 = vld [vmem:[%s482 + $0x70] sm:$0xf]
        %v1049 = vld [vmem:[%s482 + $0x74] sm:$0xf]
        %v1050 = vld [vmem:[%s482 + $0x78] sm:$0xf]
        %v1051 = vld [vmem:[%s482 + $0x7c] sm:$0xf]
        %v1052 = vld [vmem:[%s7] sm:$0xf]
        %v1053 = vld [vmem:[%s7 + $0x4] sm:$0xf]
        %v1054 = vld [vmem:[%s7 + $0x8] sm:$0xf]
        %v1055 = vld [vmem:[%s7 + $0xc] sm:$0xf]
        %v1056 = vld [vmem:[%s7 + $0x10] sm:$0xf]
        %v1057 = vld [vmem:[%s7 + $0x14] sm:$0x3]
        %v1090 = vunpack.c.l.b16 %v1020
        %v1091 = vunpack.c.l.b16 %v1021
        %v1092 = vunpack.c.l.b16 %v1022
        %v1093 = vunpack.c.l.b16 %v1023
        %v1094 = vunpack.c.l.b16 %v1024
        %v1095 = vunpack.c.l.b16 %v1025
        %v1096 = vunpack.c.l.b16 %v1026
        %v1097 = vunpack.c.l.b16 %v1027
        %v1098 = vunpack.c.l.b16 %v1028
        %v1099 = vunpack.c.l.b16 %v1029
        %v1100 = vunpack.c.l.b16 %v1030
        %v1101 = vunpack.c.l.b16 %v1031
        %v1102 = vunpack.c.l.b16 %v1032
        %v1103 = vunpack.c.l.b16 %v1033
        %v1104 = vunpack.c.l.b16 %v1034
        %v1105 = vunpack.c.l.b16 %v1035
        %v1106 = vunpack.c.l.b16 %v1036
        %v1107 = vunpack.c.l.b16 %v1037
        %v1108 = vunpack.c.l.b16 %v1038
        %v1109 = vunpack.c.l.b16 %v1039
        %v1110 = vunpack.c.l.b16 %v1040
        %v1111 = vunpack.c.l.b16 %v1041
        %v1112 = vunpack.c.l.b16 %v1042
        %v1113 = vunpack.c.l.b16 %v1043
        %v1114 = vunpack.c.l.b16 %v1044
        %v1115 = vunpack.c.l.b16 %v1045
        %v1116 = vunpack.c.l.b16 %v1046
        %v1117 = vunpack.c.l.b16 %v1047
        %v1118 = vunpack.c.l.b16 %v1048
        %v1119 = vunpack.c.l.b16 %v1049
        %v1120 = vunpack.c.l.b16 %v1050
        %v1121 = vunpack.c.l.b16 %v1051
        %v1122 = vpack.c.b16 %v1091, %v1090
        %v1123 = vpack.c.b16 %v1093, %v1092
        %v1124 = vpack.c.b16 %v1095, %v1094
        %v1125 = vpack.c.b16 %v1097, %v1096
        %v1126 = vpack.c.b16 %v1099, %v1098
        %v1127 = vpack.c.b16 %v1101, %v1100
        %v1128 = vpack.c.b16 %v1103, %v1102
        %v1129 = vpack.c.b16 %v1105, %v1104
        %v1130 = vpack.c.b16 %v1107, %v1106
        %v1131 = vpack.c.b16 %v1109, %v1108
        %v1132 = vpack.c.b16 %v1111, %v1110
        %v1133 = vpack.c.b16 %v1113, %v1112
        %v1134 = vpack.c.b16 %v1115, %v1114
        %v1135 = vpack.c.b16 %v1117, %v1116
        %v1136 = vpack.c.b16 %v1119, %v1118
        %v1137 = vpack.c.b16 %v1121, %v1120
        %v1144 = vunpack.c.l.b16 %v1052
        %v1145 = vunpack.c.l.b16 %v1053
        %v1146 = vunpack.c.l.b16 %v1054
        %v1147 = vunpack.c.l.b16 %v1055
        %v1148 = vunpack.c.l.b16 %v1056
        %v1149 = vunpack.c.l.b16 %v1057
        %v1150 = vpack.c.b16 %v1145, %v1144
        %v1151 = vpack.c.b16 %v1147, %v1146
        %v1152 = vpack.c.b16 %v1149, %v1148
        %vm1155 = vcmask 351232
        %v1157 = vsel %vm1155, %v1122, 0
        %v1160 = vsel %vm1155, %v1123, 0
        %v1163 = vsel %vm1155, %v1124, 0
        %v1166 = vsel %vm1155, %v1125, 0
        %v1169 = vsel %vm1155, %v1126, 0
        %v1172 = vsel %vm1155, %v1127, 0
        %v1175 = vsel %vm1155, %v1128, 0
        %v1178 = vsel %vm1155, %v1129, 0
        %v1181 = vsel %vm1155, %v1130, 0
        %v1184 = vsel %vm1155, %v1131, 0
        %v1187 = vsel %vm1155, %v1132, 0
        %v1190 = vsel %vm1155, %v1133, 0
        %v1193 = vsel %vm1155, %v1134, 0
        %v1196 = vsel %vm1155, %v1135, 0
        %v1199 = vsel %vm1155, %v1136, 0
        %v1202 = vsel %vm1155, %v1137, 0
        %vm1204 = vcmask 1044480
        %vm1205 = vcmask 1045504
        %v1206 = vsel %vm1204, 4294967295, 65535
        %v1207 = vsel %vm1205, %v1206, 0
        %v1209 = vand.u32 %v1152, %v1207
        %1211 = vmatprep.subr.bf16.mxu0 0
        %1212 = vmatpush1.bf16.msra.mxu0 %v1150
        %1213 = vmatprep.subr.bf16.mxu0 0
        %1214 = vmatpush1.bf16.msra.mxu0 %v1151
        %1215 = vmatprep.subr.bf16.mxu0 0
        %1216 = vmatpush1.bf16.msra.mxu0 %v1209
        %1217 = vmatprep.subr.bf16.mxu0 0
        %1218 = vmatpush1.bf16.msra.mxu0 0
        %1219 = vmatprep.subr.bf16.mxu0 0
        %1220 = vmatpush1.bf16.msra.mxu0 0
        %1221 = vmatprep.subr.bf16.mxu0 0
        %1222 = vmatpush1.bf16.msra.mxu0 0
        %1223 = vmatprep.subr.bf16.mxu0 0
        %1224 = vmatpush1.bf16.msra.mxu0 0
        %1225 = vmatprep.subr.bf16.mxu0 0
        %1226 = vmatpush1.bf16.msra.mxu0 0
        %1227 = vmatprep.subr.bf16.mxu0 0
        %1228 = vmatpush1.bf16.msra.mxu0 0
        %1229 = vmatprep.subr.bf16.mxu0 0
        %1230 = vmatpush1.bf16.msra.mxu0 0
        %1231 = vmatprep.subr.bf16.mxu0 0
        %1232 = vmatpush1.bf16.msra.mxu0 0
        %1233 = vmatprep.subr.bf16.mxu0 0
        %1234 = vmatpush1.bf16.msra.mxu0 0
        %1235 = vmatprep.subr.bf16.mxu0 0
        %1236 = vmatpush1.bf16.msra.mxu0 0
        %1237 = vmatprep.subr.bf16.mxu0 0
        %1238 = vmatpush1.bf16.msra.mxu0 0
        %1239 = vmatprep.subr.bf16.mxu0 0
        %1240 = vmatpush1.bf16.msra.mxu0 0
        %1241 = vmatprep.subr.bf16.mxu0 0
        %1242 = vmatpush1.bf16.msra.mxu0 0
        %1243 = vmatprep.mubr.bf16.mxu0 0
        %1244 = vmatmul.mubr.bf16.gmra.mrb[0].mxu0 %v1157
        %v1245 = vpop.f32.mrb[0].mxu0
        %v1246 = vadd.f32 0.0, %v1245
        %v1247 = vpop.f32.mrb[0].mxu0
        %v1248 = vpop.f32.mrb[0].mxu0
        %v1249 = vadd.f32 0.0, %v1248
        %v1250 = vpop.f32.mrb[0].mxu0
        %1251 = vmatprep.mubr.bf16.mxu0 0
        %1252 = vmatmul.mubr.bf16.gmra.mrb[0].mxu0 %v1160
        %v1253 = vpop.f32.mrb[0].mxu0
        %v1254 = vadd.f32 0.0, %v1253
        %v1255 = vpop.f32.mrb[0].mxu0
        %v1256 = vpop.f32.mrb[0].mxu0
        %v1257 = vadd.f32 0.0, %v1256
        %v1258 = vpop.f32.mrb[0].mxu0
        %1259 = vmatprep.mubr.bf16.mxu0 0
        %1260 = vmatmul.mubr.bf16.gmra.mrb[0].mxu0 %v1163
        %v1261 = vpop.f32.mrb[0].mxu0
        %v1262 = vadd.f32 0.0, %v1261
        %v1263 = vpop.f32.mrb[0].mxu0
        %v1264 = vpop.f32.mrb[0].mxu0
        %v1265 = vadd.f32 0.0, %v1264
        %v1266 = vpop.f32.mrb[0].mxu0
        %1267 = vmatprep.mubr.bf16.mxu0 0
        %1268 = vmatmul.mubr.bf16.gmra.mrb[0].mxu0 %v1166
        %v1269 = vpop.f32.mrb[0].mxu0
        %v1270 = vadd.f32 0.0, %v1269
        %v1271 = vpop.f32.mrb[0].mxu0
        %v1272 = vpop.f32.mrb[0].mxu0
        %v1273 = vadd.f32 0.0, %v1272
        %v1274 = vpop.f32.mrb[0].mxu0
        %1275 = vmatprep.mubr.bf16.mxu0 0
        %1276 = vmatmul.mubr.bf16.gmra.mrb[0].mxu0 %v1169
        %v1277 = vpop.f32.mrb[0].mxu0
        %v1278 = vadd.f32 0.0, %v1277
        %v1279 = vpop.f32.mrb[0].mxu0
        %v1280 = vpop.f32.mrb[0].mxu0
        %v1281 = vadd.f32 0.0, %v1280
        %v1282 = vpop.f32.mrb[0].mxu0
        %1283 = vmatprep.mubr.bf16.mxu0 0
        %1284 = vmatmul.mubr.bf16.gmra.mrb[0].mxu0 %v1172
        %v1285 = vpop.f32.mrb[0].mxu0
        %v1286 = vadd.f32 0.0, %v1285
        %v1287 = vpop.f32.mrb[0].mxu0
        %v1288 = vpop.f32.mrb[0].mxu0
        %v1289 = vadd.f32 0.0, %v1288
        %v1290 = vpop.f32.mrb[0].mxu0
        %1291 = vmatprep.mubr.bf16.mxu0 0
        %1292 = vmatmul.mubr.bf16.gmra.mrb[0].mxu0 %v1175
        %v1293 = vpop.f32.mrb[0].mxu0
        %v1294 = vadd.f32 0.0, %v1293
        %v1295 = vpop.f32.mrb[0].mxu0
        %v1296 = vpop.f32.mrb[0].mxu0
        %v1297 = vadd.f32 0.0, %v1296
        %v1298 = vpop.f32.mrb[0].mxu0
        %1299 = vmatprep.mubr.bf16.mxu0 0
        %1300 = vmatmul.mubr.bf16.gmra.mrb[0].mxu0 %v1178
        %v1301 = vpop.f32.mrb[0].mxu0
        %v1302 = vadd.f32 0.0, %v1301
        %v1303 = vpop.f32.mrb[0].mxu0
        %v1304 = vpop.f32.mrb[0].mxu0
        %v1305 = vadd.f32 0.0, %v1304
        %v1306 = vpop.f32.mrb[0].mxu0
        %1307 = vmatprep.mubr.bf16.mxu0 0
        %1308 = vmatmul.mubr.bf16.gmra.mrb[0].mxu0 %v1181
        %v1309 = vpop.f32.mrb[0].mxu0
        %v1310 = vadd.f32 0.0, %v1309
        %v1311 = vpop.f32.mrb[0].mxu0
        %v1312 = vpop.f32.mrb[0].mxu0
        %v1313 = vadd.f32 0.0, %v1312
        %v1314 = vpop.f32.mrb[0].mxu0
        %1315 = vmatprep.mubr.bf16.mxu0 0
        %1316 = vmatmul.mubr.bf16.gmra.mrb[0].mxu0 %v1184
        %v1317 = vpop.f32.mrb[0].mxu0
        %v1318 = vadd.f32 0.0, %v1317
        %v1319 = vpop.f32.mrb[0].mxu0
        %v1320 = vpop.f32.mrb[0].mxu0
        %v1321 = vadd.f32 0.0, %v1320
        %v1322 = vpop.f32.mrb[0].mxu0
        %1323 = vmatprep.mubr.bf16.mxu0 0
        %1324 = vmatmul.mubr.bf16.gmra.mrb[0].mxu0 %v1187
        %v1325 = vpop.f32.mrb[0].mxu0
        %v1326 = vadd.f32 0.0, %v1325
        %v1327 = vpop.f32.mrb[0].mxu0
        %v1328 = vpop.f32.mrb[0].mxu0
        %v1329 = vadd.f32 0.0, %v1328
        %v1330 = vpop.f32.mrb[0].mxu0
        %1331 = vmatprep.mubr.bf16.mxu0 0
        %1332 = vmatmul.mubr.bf16.gmra.mrb[0].mxu0 %v1190
        %v1333 = vpop.f32.mrb[0].mxu0
        %v1334 = vadd.f32 0.0, %v1333
        %v1335 = vpop.f32.mrb[0].mxu0
        %v1336 = vpop.f32.mrb[0].mxu0
        %v1337 = vadd.f32 0.0, %v1336
        %v1338 = vpop.f32.mrb[0].mxu0
        %1339 = vmatprep.mubr.bf16.mxu0 0
        %1340 = vmatmul.mubr.bf16.gmra.mrb[0].mxu0 %v1193
        %v1341 = vpop.f32.mrb[0].mxu0
        %v1342 = vadd.f32 0.0, %v1341
        %v1343 = vpop.f32.mrb[0].mxu0
        %v1344 = vpop.f32.mrb[0].mxu0
        %v1345 = vadd.f32 0.0, %v1344
        %v1346 = vpop.f32.mrb[0].mxu0
        %1347 = vmatprep.mubr.bf16.mxu0 0
        %1348 = vmatmul.mubr.bf16.gmra.mrb[0].mxu0 %v1196
        %v1349 = vpop.f32.mrb[0].mxu0
        %v1350 = vadd.f32 0.0, %v1349
        %v1351 = vpop.f32.mrb[0].mxu0
        %v1352 = vpop.f32.mrb[0].mxu0
        %v1353 = vadd.f32 0.0, %v1352
        %v1354 = vpop.f32.mrb[0].mxu0
        %1355 = vmatprep.mubr.bf16.mxu0 0
        %1356 = vmatmul.mubr.bf16.gmra.mrb[0].mxu0 %v1199
        %v1357 = vpop.f32.mrb[0].mxu0
        %v1358 = vadd.f32 0.0, %v1357
        %v1359 = vpop.f32.mrb[0].mxu0
        %v1360 = vpop.f32.mrb[0].mxu0
        %v1361 = vadd.f32 0.0, %v1360
        %v1362 = vpop.f32.mrb[0].mxu0
        %1363 = vmatprep.mubr.bf16.mxu0 0
        %1364 = vmatmul.mubr.bf16.gmra.mrb[0].mxu0 %v1202
        %v1365 = vpop.f32.mrb[0].mxu0
        %v1366 = vadd.f32 0.0, %v1365
        %v1367 = vpop.f32.mrb[0].mxu0
        %v1368 = vpop.f32.mrb[0].mxu0
        %v1369 = vadd.f32 0.0, %v1368
        %v1370 = vpop.f32.mrb[0].mxu0
        %1371 = vdwg.mxu0
        %v1372 = vld [vmem:[%s491] sm:$0xff]
        %v1373 = vld [vmem:[%s491 + $0x8] sm:$0xff]
        %v1374 = vld [vmem:[#allocation8] sm:$0xff]
        %v1375 = vld [vmem:[#allocation8 + $0x8] sm:$0xff]
        %v1376 = vld [vmem:[#allocation8 + $0x10] sm:$0xff]
        %v1377 = vld [vmem:[#allocation8 + $0x18] sm:$0xff]
        %v1378 = vadd.f32 %v942, %v1246
        %v1379 = vadd.f32 %v947, %v1249
        %v1380 = vadd.f32 %v952, %v1254
        %v1381 = vadd.f32 %v957, %v1257
        %v1382 = vadd.f32 %v962, %v1262
        %v1383 = vadd.f32 %v967, %v1265
        %v1384 = vadd.f32 %v972, %v1270
        %v1385 = vadd.f32 %v977, %v1273
        %v1386 = vadd.f32 %v982, %v1278
        %v1387 = vadd.f32 %v987, %v1281
        %v1388 = vadd.f32 %v992, %v1286
        %v1389 = vadd.f32 %v997, %v1289
        %v1390 = vadd.f32 %v1002, %v1294
        %v1391 = vadd.f32 %v1007, %v1297
        %v1392 = vadd.f32 %v1012, %v1302
        %v1393 = vadd.f32 %v1017, %v1305
        %v1395 = vcombine.high %v1372, %v1372
        %v1397 = vunpack.c.l.s4 1966171168
        %v1398 = vunpack.c.0.s8 %v1397
        %v1399 = vlaneseq
        %v1400 = vshrl.u32 %v1399, 7
        %v1401 = vsub.s32 %v1398, %v1400
        %v1402 = vrot.slane %v1372, %v1401
        %v1404 = vunpack.c.l.s4 1966171168
        %v1405 = vunpack.c.0.s8 %v1404
        %v1406 = vlaneseq
        %v1407 = vshrl.u32 %v1406, 7
        %v1408 = vsub.s32 %v1405, %v1407
        %v1409 = vrot.slane %v1395, %v1408
        %v1410 = vcombine.high %v1402, %v1402
        %v1411 = vcombine.high %v1409, %v1409
        %v1413 = vunpack.c.l.s4 1966171168
        %v1414 = vunpack.c.0.s8 %v1413
        %v1415 = vlaneseq
        %v1416 = vshrl.u32 %v1415, 7
        %v1417 = vsub.s32 %v1414, %v1416
        %v1418 = vrot.slane %v1402, %v1417
        %v1420 = vunpack.c.l.s4 1966171168
        %v1421 = vunpack.c.0.s8 %v1420
        %v1422 = vlaneseq
        %v1423 = vshrl.u32 %v1422, 7
        %v1424 = vsub.s32 %v1421, %v1423
        %v1425 = vrot.slane %v1409, %v1424
        %v1427 = vunpack.c.l.s4 1966171168
        %v1428 = vunpack.c.0.s8 %v1427
        %v1429 = vlaneseq
        %v1430 = vshrl.u32 %v1429, 7
        %v1431 = vsub.s32 %v1428, %v1430
        %v1432 = vrot.slane %v1410, %v1431
        %v1434 = vunpack.c.l.s4 1966171168
        %v1435 = vunpack.c.0.s8 %v1434
        %v1436 = vlaneseq
        %v1437 = vshrl.u32 %v1436, 7
        %v1438 = vsub.s32 %v1435, %v1437
        %v1439 = vrot.slane %v1411, %v1438
        %v1440 = vcombine.high %v1418, %v1418
        %v1441 = vcombine.high %v1425, %v1425
        %v1442 = vcombine.high %v1432, %v1432
        %v1443 = vcombine.high %v1439, %v1439
        %v1444 = vlaneseq
        %v1445 = vshrl.u32 %v1444, 7
        %v1446 = vsub.s32 0, %v1445
        %v1447 = vrot.slane %v1418, %v1446
        %v1448 = vlaneseq
        %v1449 = vshrl.u32 %v1448, 7
        %v1450 = vsub.s32 0, %v1449
        %v1451 = vrot.slane %v1432, %v1450
        %v1452 = vlaneseq
        %v1453 = vshrl.u32 %v1452, 7
        %v1454 = vsub.s32 0, %v1453
        %v1455 = vrot.slane %v1440, %v1454
        %v1456 = vlaneseq
        %v1457 = vshrl.u32 %v1456, 7
        %v1458 = vsub.s32 0, %v1457
        %v1459 = vrot.slane %v1442, %v1458
        %v1460 = vlaneseq
        %v1461 = vshrl.u32 %v1460, 7
        %v1462 = vsub.s32 0, %v1461
        %v1463 = vrot.slane %v1425, %v1462
        %v1464 = vlaneseq
        %v1465 = vshrl.u32 %v1464, 7
        %v1466 = vsub.s32 0, %v1465
        %v1467 = vrot.slane %v1439, %v1466
        %v1468 = vlaneseq
        %v1469 = vshrl.u32 %v1468, 7
        %v1470 = vsub.s32 0, %v1469
        %v1471 = vrot.slane %v1441, %v1470
        %v1472 = vlaneseq
        %v1473 = vshrl.u32 %v1472, 7
        %v1474 = vsub.s32 0, %v1473
        %v1475 = vrot.slane %v1443, %v1474
        %v1484 = vadd.f32 %v1378, %v1447
        %v1485 = vadd.f32 %v1379, %v1447
        %v1486 = vadd.f32 %v1380, %v1451
        %v1487 = vadd.f32 %v1381, %v1451
        %v1488 = vadd.f32 %v1382, %v1455
        %v1489 = vadd.f32 %v1383, %v1455
        %v1490 = vadd.f32 %v1384, %v1459
        %v1491 = vadd.f32 %v1385, %v1459
        %v1492 = vadd.f32 %v1386, %v1463
        %v1493 = vadd.f32 %v1387, %v1463
        %v1494 = vadd.f32 %v1388, %v1467
        %v1495 = vadd.f32 %v1389, %v1467
        %v1496 = vadd.f32 %v1390, %v1471
        %v1497 = vadd.f32 %v1391, %v1471
        %v1498 = vadd.f32 %v1392, %v1475
        %v1499 = vadd.f32 %v1393, %v1475
        %v1500 = vadd.f32 %v1484, %v1374
        %v1501 = vadd.f32 %v1485, %v1375
        %v1502 = vadd.f32 %v1486, %v1374
        %v1503 = vadd.f32 %v1487, %v1375
        %v1504 = vadd.f32 %v1488, %v1374
        %v1505 = vadd.f32 %v1489, %v1375
        %v1506 = vadd.f32 %v1490, %v1374
        %v1507 = vadd.f32 %v1491, %v1375
        %v1508 = vadd.f32 %v1492, %v1374
        %v1509 = vadd.f32 %v1493, %v1375
        %v1510 = vadd.f32 %v1494, %v1374
        %v1511 = vadd.f32 %v1495, %v1375
        %v1512 = vadd.f32 %v1496, %v1374
        %v1513 = vadd.f32 %v1497, %v1375
        %v1514 = vadd.f32 %v1498, %v1374
        %v1515 = vadd.f32 %v1499, %v1375
        %1516 = vadd.xlane.f32.xlu0 %v1500
        %v1517 = vpop.xlane.xlu0 %1516
        %1518 = vadd.xlane.f32.xlu0 %v1501
        %v1519 = vpop.xlane.xlu0 %1518
        %1520 = vadd.xlane.f32.xlu0 %v1502
        %v1521 = vpop.xlane.xlu0 %1520
        %1522 = vadd.xlane.f32.xlu0 %v1503
        %v1523 = vpop.xlane.xlu0 %1522
        %1524 = vadd.xlane.f32.xlu0 %v1504
        %v1525 = vpop.xlane.xlu0 %1524
        %1526 = vadd.xlane.f32.xlu0 %v1505
        %v1527 = vpop.xlane.xlu0 %1526
        %1528 = vadd.xlane.f32.xlu0 %v1506
        %v1529 = vpop.xlane.xlu0 %1528
        %1530 = vadd.xlane.f32.xlu0 %v1507
        %v1531 = vpop.xlane.xlu0 %1530
        %1532 = vadd.xlane.f32.xlu0 %v1508
        %v1533 = vpop.xlane.xlu0 %1532
        %1534 = vadd.xlane.f32.xlu0 %v1509
        %v1535 = vpop.xlane.xlu0 %1534
        %1536 = vadd.xlane.f32.xlu0 %v1510
        %v1537 = vpop.xlane.xlu0 %1536
        %1538 = vadd.xlane.f32.xlu0 %v1511
        %v1539 = vpop.xlane.xlu0 %1538
        %1540 = vadd.xlane.f32.xlu0 %v1512
        %v1541 = vpop.xlane.xlu0 %1540
        %1542 = vadd.xlane.f32.xlu0 %v1513
        %v1543 = vpop.xlane.xlu0 %1542
        %1544 = vadd.xlane.f32.xlu0 %v1514
        %v1545 = vpop.xlane.xlu0 %1544
        %1546 = vadd.xlane.f32.xlu0 %v1515
        %v1547 = vpop.xlane.xlu0 %1546
        %v1548 = vmul.f32 %v1517, %v620
        %v1549 = vmul.f32 %v1519, %v620
        %v1550 = vmul.f32 %v1521, %v620
        %v1551 = vmul.f32 %v1523, %v620
        %v1552 = vmul.f32 %v1525, %v620
        %v1553 = vmul.f32 %v1527, %v620
        %v1554 = vmul.f32 %v1529, %v620
        %v1555 = vmul.f32 %v1531, %v620
        %v1556 = vmul.f32 %v1533, %v620
        %v1557 = vmul.f32 %v1535, %v620
        %v1558 = vmul.f32 %v1537, %v620
        %v1559 = vmul.f32 %v1539, %v620
        %v1560 = vmul.f32 %v1541, %v620
        %v1561 = vmul.f32 %v1543, %v620
        %v1562 = vmul.f32 %v1545, %v620
        %v1563 = vmul.f32 %v1547, %v620
        %v1564 = vmul.f32 %v1500, %v1500
        %v1565 = vmul.f32 %v1501, %v1501
        %v1566 = vmul.f32 %v1502, %v1502
        %v1567 = vmul.f32 %v1503, %v1503
        %v1568 = vmul.f32 %v1504, %v1504
        %v1569 = vmul.f32 %v1505, %v1505
        %v1570 = vmul.f32 %v1506, %v1506
        %v1571 = vmul.f32 %v1507, %v1507
        %v1572 = vmul.f32 %v1508, %v1508
        %v1573 = vmul.f32 %v1509, %v1509
        %v1574 = vmul.f32 %v1510, %v1510
        %v1575 = vmul.f32 %v1511, %v1511
        %v1576 = vmul.f32 %v1512, %v1512
        %v1577 = vmul.f32 %v1513, %v1513
        %v1578 = vmul.f32 %v1514, %v1514
        %v1579 = vmul.f32 %v1515, %v1515
        %1580 = vadd.xlane.f32.xlu0 %v1564
        %v1581 = vpop.xlane.xlu0 %1580
        %1582 = vadd.xlane.f32.xlu0 %v1565
        %v1583 = vpop.xlane.xlu0 %1582
        %1584 = vadd.xlane.f32.xlu0 %v1566
        %v1585 = vpop.xlane.xlu0 %1584
        %1586 = vadd.xlane.f32.xlu0 %v1567
        %v1587 = vpop.xlane.xlu0 %1586
        %1588 = vadd.xlane.f32.xlu0 %v1568
        %v1589 = vpop.xlane.xlu0 %1588
        %1590 = vadd.xlane.f32.xlu0 %v1569
        %v1591 = vpop.xlane.xlu0 %1590
        %1592 = vadd.xlane.f32.xlu0 %v1570
        %v1593 = vpop.xlane.xlu0 %1592
        %1594 = vadd.xlane.f32.xlu0 %v1571
        %v1595 = vpop.xlane.xlu0 %1594
        %1596 = vadd.xlane.f32.xlu0 %v1572
        %v1597 = vpop.xlane.xlu0 %1596
        %1598 = vadd.xlane.f32.xlu0 %v1573
        %v1599 = vpop.xlane.xlu0 %1598
        %1600 = vadd.xlane.f32.xlu0 %v1574
        %v1601 = vpop.xlane.xlu0 %1600
        %1602 = vadd.xlane.f32.xlu0 %v1575
        %v1603 = vpop.xlane.xlu0 %1602
        %1604 = vadd.xlane.f32.xlu0 %v1576
        %v1605 = vpop.xlane.xlu0 %1604
        %1606 = vadd.xlane.f32.xlu0 %v1577
        %v1607 = vpop.xlane.xlu0 %1606
        %1608 = vadd.xlane.f32.xlu0 %v1578
        %v1609 = vpop.xlane.xlu0 %1608
        %1610 = vadd.xlane.f32.xlu0 %v1579
        %v1611 = vpop.xlane.xlu0 %1610
        %v1612 = vmul.f32 %v1581, %v620
        %v1613 = vmul.f32 %v1583, %v620
        %v1614 = vmul.f32 %v1585, %v620
        %v1615 = vmul.f32 %v1587, %v620
        %v1616 = vmul.f32 %v1589, %v620
        %v1617 = vmul.f32 %v1591, %v620
        %v1618 = vmul.f32 %v1593, %v620
        %v1619 = vmul.f32 %v1595, %v620
        %v1620 = vmul.f32 %v1597, %v620
        %v1621 = vmul.f32 %v1599, %v620
        %v1622 = vmul.f32 %v1601, %v620
        %v1623 = vmul.f32 %v1603, %v620
        %v1624 = vmul.f32 %v1605, %v620
        %v1625 = vmul.f32 %v1607, %v620
        %v1626 = vmul.f32 %v1609, %v620
        %v1627 = vmul.f32 %v1611, %v620
        %v1628 = vmul.f32 %v1548, %v1548
        %v1629 = vmul.f32 %v1549, %v1549
        %v1630 = vmul.f32 %v1550, %v1550
        %v1631 = vmul.f32 %v1551, %v1551
        %v1632 = vmul.f32 %v1552, %v1552
        %v1633 = vmul.f32 %v1553, %v1553
        %v1634 = vmul.f32 %v1554, %v1554
        %v1635 = vmul.f32 %v1555, %v1555
        %v1636 = vmul.f32 %v1556, %v1556
        %v1637 = vmul.f32 %v1557, %v1557
        %v1638 = vmul.f32 %v1558, %v1558
        %v1639 = vmul.f32 %v1559, %v1559
        %v1640 = vmul.f32 %v1560, %v1560
        %v1641 = vmul.f32 %v1561, %v1561
        %v1642 = vmul.f32 %v1562, %v1562
        %v1643 = vmul.f32 %v1563, %v1563
        %v1644 = vsub.f32 %v1612, %v1628
        %v1645 = vsub.f32 %v1613, %v1629
        %v1646 = vsub.f32 %v1614, %v1630
        %v1647 = vsub.f32 %v1615, %v1631
        %v1648 = vsub.f32 %v1616, %v1632
        %v1649 = vsub.f32 %v1617, %v1633
        %v1650 = vsub.f32 %v1618, %v1634
        %v1651 = vsub.f32 %v1619, %v1635
        %v1652 = vsub.f32 %v1620, %v1636
        %v1653 = vsub.f32 %v1621, %v1637
        %v1654 = vsub.f32 %v1622, %v1638
        %v1655 = vsub.f32 %v1623, %v1639
        %v1656 = vsub.f32 %v1624, %v1640
        %v1657 = vsub.f32 %v1625, %v1641
        %v1658 = vsub.f32 %v1626, %v1642
        %v1659 = vsub.f32 %v1627, %v1643
        %v1660 = vmax.f32 %v1644, 0.0
        %v1661 = vmax.f32 %v1645, 0.0
        %v1662 = vmax.f32 %v1646, 0.0
        %v1663 = vmax.f32 %v1647, 0.0
        %v1664 = vmax.f32 %v1648, 0.0
        %v1665 = vmax.f32 %v1649, 0.0
        %v1666 = vmax.f32 %v1650, 0.0
        %v1667 = vmax.f32 %v1651, 0.0
        %v1668 = vmax.f32 %v1652, 0.0
        %v1669 = vmax.f32 %v1653, 0.0
        %v1670 = vmax.f32 %v1654, 0.0
        %v1671 = vmax.f32 %v1655, 0.0
        %v1672 = vmax.f32 %v1656, 0.0
        %v1673 = vmax.f32 %v1657, 0.0
        %v1674 = vmax.f32 %v1658, 0.0
        %v1675 = vmax.f32 %v1659, 0.0
        %v1676 = vsub.f32 %v1500, %v1548
        %v1677 = vsub.f32 %v1501, %v1549
        %v1678 = vsub.f32 %v1502, %v1550
        %v1679 = vsub.f32 %v1503, %v1551
        %v1680 = vsub.f32 %v1504, %v1552
        %v1681 = vsub.f32 %v1505, %v1553
        %v1682 = vsub.f32 %v1506, %v1554
        %v1683 = vsub.f32 %v1507, %v1555
        %v1684 = vsub.f32 %v1508, %v1556
        %v1685 = vsub.f32 %v1509, %v1557
        %v1686 = vsub.f32 %v1510, %v1558
        %v1687 = vsub.f32 %v1511, %v1559
        %v1688 = vsub.f32 %v1512, %v1560
        %v1689 = vsub.f32 %v1513, %v1561
        %v1690 = vsub.f32 %v1514, %v1562
        %v1691 = vsub.f32 %v1515, %v1563
        %v1692 = vadd.f32 %v1660, 1e-05
        %v1693 = vadd.f32 %v1661, 1e-05
        %v1694 = vadd.f32 %v1662, 1e-05
        %v1695 = vadd.f32 %v1663, 1e-05
        %v1696 = vadd.f32 %v1664, 1e-05
        %v1697 = vadd.f32 %v1665, 1e-05
        %v1698 = vadd.f32 %v1666, 1e-05
        %v1699 = vadd.f32 %v1667, 1e-05
        %v1700 = vadd.f32 %v1668, 1e-05
        %v1701 = vadd.f32 %v1669, 1e-05
        %v1702 = vadd.f32 %v1670, 1e-05
        %v1703 = vadd.f32 %v1671, 1e-05
        %v1704 = vadd.f32 %v1672, 1e-05
        %v1705 = vadd.f32 %v1673, 1e-05
        %v1706 = vadd.f32 %v1674, 1e-05
        %v1707 = vadd.f32 %v1675, 1e-05
        %v1708 = vrsqrt.pop %v1692
        %v1709 = vrsqrt.pop %v1693
        %v1710 = vrsqrt.pop %v1694
        %v1711 = vrsqrt.pop %v1695
        %v1712 = vrsqrt.pop %v1696
        %v1713 = vrsqrt.pop %v1697
        %v1714 = vrsqrt.pop %v1698
        %v1715 = vrsqrt.pop %v1699
        %v1716 = vrsqrt.pop %v1700
        %v1717 = vrsqrt.pop %v1701
        %v1718 = vrsqrt.pop %v1702
        %v1719 = vrsqrt.pop %v1703
        %v1720 = vrsqrt.pop %v1704
        %v1721 = vrsqrt.pop %v1705
        %v1722 = vrsqrt.pop %v1706
        %v1723 = vrsqrt.pop %v1707
        %v1724 = vmul.f32 %v1676, %v1708
        %v1725 = vmul.f32 %v1677, %v1709
        %v1726 = vmul.f32 %v1678, %v1710
        %v1727 = vmul.f32 %v1679, %v1711
        %v1728 = vmul.f32 %v1680, %v1712
        %v1729 = vmul.f32 %v1681, %v1713
        %v1730 = vmul.f32 %v1682, %v1714
        %v1731 = vmul.f32 %v1683, %v1715
        %v1732 = vmul.f32 %v1684, %v1716
        %v1733 = vmul.f32 %v1685, %v1717
        %v1734 = vmul.f32 %v1686, %v1718
        %v1735 = vmul.f32 %v1687, %v1719
        %v1736 = vmul.f32 %v1688, %v1720
        %v1737 = vmul.f32 %v1689, %v1721
        %v1738 = vmul.f32 %v1690, %v1722
        %v1739 = vmul.f32 %v1691, %v1723
        %v1740 = vadd.f32 %v1724, 0.0
        %v1741 = vadd.f32 %v1725, 0.0
        %v1742 = vadd.f32 %v1726, 0.0
        %v1743 = vadd.f32 %v1727, 0.0
        %v1744 = vadd.f32 %v1728, 0.0
        %v1745 = vadd.f32 %v1729, 0.0
        %v1746 = vadd.f32 %v1730, 0.0
        %v1747 = vadd.f32 %v1731, 0.0
        %v1748 = vadd.f32 %v1732, 0.0
        %v1749 = vadd.f32 %v1733, 0.0
        %v1750 = vadd.f32 %v1734, 0.0
        %v1751 = vadd.f32 %v1735, 0.0
        %v1752 = vadd.f32 %v1736, 0.0
        %v1753 = vadd.f32 %v1737, 0.0
        %v1754 = vadd.f32 %v1738, 0.0
        %v1755 = vadd.f32 %v1739, 0.0
        %v1756 = vadd.f32 %v942, %v1310
        %v1757 = vadd.f32 %v947, %v1313
        %v1758 = vadd.f32 %v952, %v1318
        %v1759 = vadd.f32 %v957, %v1321
        %v1760 = vadd.f32 %v962, %v1326
        %v1761 = vadd.f32 %v967, %v1329
        %v1762 = vadd.f32 %v972, %v1334
        %v1763 = vadd.f32 %v977, %v1337
        %v1764 = vadd.f32 %v982, %v1342
        %v1765 = vadd.f32 %v987, %v1345
        %v1766 = vadd.f32 %v992, %v1350
        %v1767 = vadd.f32 %v997, %v1353
        %v1768 = vadd.f32 %v1002, %v1358
        %v1769 = vadd.f32 %v1007, %v1361
        %v1770 = vadd.f32 %v1012, %v1366
        %v1771 = vadd.f32 %v1017, %v1369
        %v1773 = vcombine.high %v1373, %v1373
        %v1775 = vunpack.c.l.s4 1966171168
        %v1776 = vunpack.c.0.s8 %v1775
        %v1777 = vlaneseq
        %v1778 = vshrl.u32 %v1777, 7
        %v1779 = vsub.s32 %v1776, %v1778
        %v1780 = vrot.slane %v1373, %v1779
        %v1782 = vunpack.c.l.s4 1966171168
        %v1783 = vunpack.c.0.s8 %v1782
        %v1784 = vlaneseq
        %v1785 = vshrl.u32 %v1784, 7
        %v1786 = vsub.s32 %v1783, %v1785
        %v1787 = vrot.slane %v1773, %v1786
        %v1788 = vcombine.high %v1780, %v1780
        %v1789 = vcombine.high %v1787, %v1787
        %v1791 = vunpack.c.l.s4 1966171168
        %v1792 = vunpack.c.0.s8 %v1791
        %v1793 = vlaneseq
        %v1794 = vshrl.u32 %v1793, 7
        %v1795 = vsub.s32 %v1792, %v1794
        %v1796 = vrot.slane %v1780, %v1795
        %v1798 = vunpack.c.l.s4 1966171168
        %v1799 = vunpack.c.0.s8 %v1798
        %v1800 = vlaneseq
        %v1801 = vshrl.u32 %v1800, 7
        %v1802 = vsub.s32 %v1799, %v1801
        %v1803 = vrot.slane %v1787, %v1802
        %v1805 = vunpack.c.l.s4 1966171168
        %v1806 = vunpack.c.0.s8 %v1805
        %v1807 = vlaneseq
        %v1808 = vshrl.u32 %v1807, 7
        %v1809 = vsub.s32 %v1806, %v1808
        %v1810 = vrot.slane %v1788, %v1809
        %v1812 = vunpack.c.l.s4 1966171168
        %v1813 = vunpack.c.0.s8 %v1812
        %v1814 = vlaneseq
        %v1815 = vshrl.u32 %v1814, 7
        %v1816 = vsub.s32 %v1813, %v1815
        %v1817 = vrot.slane %v1789, %v1816
        %v1818 = vcombine.high %v1796, %v1796
        %v1819 = vcombine.high %v1803, %v1803
        %v1820 = vcombine.high %v1810, %v1810
        %v1821 = vcombine.high %v1817, %v1817
        %v1822 = vlaneseq
        %v1823 = vshrl.u32 %v1822, 7
        %v1824 = vsub.s32 0, %v1823
        %v1825 = vrot.slane %v1796, %v1824
        %v1826 = vlaneseq
        %v1827 = vshrl.u32 %v1826, 7
        %v1828 = vsub.s32 0, %v1827
        %v1829 = vrot.slane %v1810, %v1828
        %v1830 = vlaneseq
        %v1831 = vshrl.u32 %v1830, 7
        %v1832 = vsub.s32 0, %v1831
        %v1833 = vrot.slane %v1818, %v1832
        %v1834 = vlaneseq
        %v1835 = vshrl.u32 %v1834, 7
        %v1836 = vsub.s32 0, %v1835
        %v1837 = vrot.slane %v1820, %v1836
        %v1838 = vlaneseq
        %v1839 = vshrl.u32 %v1838, 7
        %v1840 = vsub.s32 0, %v1839
        %v1841 = vrot.slane %v1803, %v1840
        %v1842 = vlaneseq
        %v1843 = vshrl.u32 %v1842, 7
        %v1844 = vsub.s32 0, %v1843
        %v1845 = vrot.slane %v1817, %v1844
        %v1846 = vlaneseq
        %v1847 = vshrl.u32 %v1846, 7
        %v1848 = vsub.s32 0, %v1847
        %v1849 = vrot.slane %v1819, %v1848
        %v1850 = vlaneseq
        %v1851 = vshrl.u32 %v1850, 7
        %v1852 = vsub.s32 0, %v1851
        %v1853 = vrot.slane %v1821, %v1852
        %v1862 = vadd.f32 %v1756, %v1825
        %v1863 = vadd.f32 %v1757, %v1825
        %v1864 = vadd.f32 %v1758, %v1829
        %v1865 = vadd.f32 %v1759, %v1829
        %v1866 = vadd.f32 %v1760, %v1833
        %v1867 = vadd.f32 %v1761, %v1833
        %v1868 = vadd.f32 %v1762, %v1837
        %v1869 = vadd.f32 %v1763, %v1837
        %v1870 = vadd.f32 %v1764, %v1841
        %v1871 = vadd.f32 %v1765, %v1841
        %v1872 = vadd.f32 %v1766, %v1845
        %v1873 = vadd.f32 %v1767, %v1845
        %v1874 = vadd.f32 %v1768, %v1849
        %v1875 = vadd.f32 %v1769, %v1849
        %v1876 = vadd.f32 %v1770, %v1853
        %v1877 = vadd.f32 %v1771, %v1853
        %v1878 = vadd.f32 %v1862, %v1376
        %v1879 = vadd.f32 %v1863, %v1377
        %v1880 = vadd.f32 %v1864, %v1376
        %v1881 = vadd.f32 %v1865, %v1377
        %v1882 = vadd.f32 %v1866, %v1376
        %v1883 = vadd.f32 %v1867, %v1377
        %v1884 = vadd.f32 %v1868, %v1376
        %v1885 = vadd.f32 %v1869, %v1377
        %v1886 = vadd.f32 %v1870, %v1376
        %v1887 = vadd.f32 %v1871, %v1377
        %v1888 = vadd.f32 %v1872, %v1376
        %v1889 = vadd.f32 %v1873, %v1377
        %v1890 = vadd.f32 %v1874, %v1376
        %v1891 = vadd.f32 %v1875, %v1377
        %v1892 = vadd.f32 %v1876, %v1376
        %v1893 = vadd.f32 %v1877, %v1377
        %1894 = vadd.xlane.f32.xlu0 %v1878
        %v1895 = vpop.xlane.xlu0 %1894
        %1896 = vadd.xlane.f32.xlu0 %v1879
        %v1897 = vpop.xlane.xlu0 %1896
        %1898 = vadd.xlane.f32.xlu0 %v1880
        %v1899 = vpop.xlane.xlu0 %1898
        %1900 = vadd.xlane.f32.xlu0 %v1881
        %v1901 = vpop.xlane.xlu0 %1900
        %1902 = vadd.xlane.f32.xlu0 %v1882
        %v1903 = vpop.xlane.xlu0 %1902
        %1904 = vadd.xlane.f32.xlu0 %v1883
        %v1905 = vpop.xlane.xlu0 %1904
        %1906 = vadd.xlane.f32.xlu0 %v1884
        %v1907 = vpop.xlane.xlu0 %1906
        %1908 = vadd.xlane.f32.xlu0 %v1885
        %v1909 = vpop.xlane.xlu0 %1908
        %1910 = vadd.xlane.f32.xlu0 %v1886
        %v1911 = vpop.xlane.xlu0 %1910
        %1912 = vadd.xlane.f32.xlu0 %v1887
        %v1913 = vpop.xlane.xlu0 %1912
        %1914 = vadd.xlane.f32.xlu0 %v1888
        %v1915 = vpop.xlane.xlu0 %1914
        %1916 = vadd.xlane.f32.xlu0 %v1889
        %v1917 = vpop.xlane.xlu0 %1916
        %1918 = vadd.xlane.f32.xlu0 %v1890
        %v1919 = vpop.xlane.xlu0 %1918
        %1920 = vadd.xlane.f32.xlu0 %v1891
        %v1921 = vpop.xlane.xlu0 %1920
        %1922 = vadd.xlane.f32.xlu0 %v1892
        %v1923 = vpop.xlane.xlu0 %1922
        %1924 = vadd.xlane.f32.xlu0 %v1893
        %v1925 = vpop.xlane.xlu0 %1924
        %v1926 = vmul.f32 %v1895, %v620
        %v1927 = vmul.f32 %v1897, %v620
        %v1928 = vmul.f32 %v1899, %v620
        %v1929 = vmul.f32 %v1901, %v620
        %v1930 = vmul.f32 %v1903, %v620
        %v1931 = vmul.f32 %v1905, %v620
        %v1932 = vmul.f32 %v1907, %v620
        %v1933 = vmul.f32 %v1909, %v620
        %v1934 = vmul.f32 %v1911, %v620
        %v1935 = vmul.f32 %v1913, %v620
        %v1936 = vmul.f32 %v1915, %v620
        %v1937 = vmul.f32 %v1917, %v620
        %v1938 = vmul.f32 %v1919, %v620
        %v1939 = vmul.f32 %v1921, %v620
        %v1940 = vmul.f32 %v1923, %v620
        %v1941 = vmul.f32 %v1925, %v620
        %v1942 = vmul.f32 %v1878, %v1878
        %v1943 = vmul.f32 %v1879, %v1879
        %v1944 = vmul.f32 %v1880, %v1880
        %v1945 = vmul.f32 %v1881, %v1881
        %v1946 = vmul.f32 %v1882, %v1882
        %v1947 = vmul.f32 %v1883, %v1883
        %v1948 = vmul.f32 %v1884, %v1884
        %v1949 = vmul.f32 %v1885, %v1885
        %v1950 = vmul.f32 %v1886, %v1886
        %v1951 = vmul.f32 %v1887, %v1887
        %v1952 = vmul.f32 %v1888, %v1888
        %v1953 = vmul.f32 %v1889, %v1889
        %v1954 = vmul.f32 %v1890, %v1890
        %v1955 = vmul.f32 %v1891, %v1891
        %v1956 = vmul.f32 %v1892, %v1892
        %v1957 = vmul.f32 %v1893, %v1893
        %1958 = vadd.xlane.f32.xlu0 %v1942
        %v1959 = vpop.xlane.xlu0 %1958
        %1960 = vadd.xlane.f32.xlu0 %v1943
        %v1961 = vpop.xlane.xlu0 %1960
        %1962 = vadd.xlane.f32.xlu0 %v1944
        %v1963 = vpop.xlane.xlu0 %1962
        %1964 = vadd.xlane.f32.xlu0 %v1945
        %v1965 = vpop.xlane.xlu0 %1964
        %1966 = vadd.xlane.f32.xlu0 %v1946
        %v1967 = vpop.xlane.xlu0 %1966
        %1968 = vadd.xlane.f32.xlu0 %v1947
        %v1969 = vpop.xlane.xlu0 %1968
        %1970 = vadd.xlane.f32.xlu0 %v1948
        %v1971 = vpop.xlane.xlu0 %1970
        %1972 = vadd.xlane.f32.xlu0 %v1949
        %v1973 = vpop.xlane.xlu0 %1972
        %1974 = vadd.xlane.f32.xlu0 %v1950
        %v1975 = vpop.xlane.xlu0 %1974
        %1976 = vadd.xlane.f32.xlu0 %v1951
        %v1977 = vpop.xlane.xlu0 %1976
        %1978 = vadd.xlane.f32.xlu0 %v1952
        %v1979 = vpop.xlane.xlu0 %1978
        %1980 = vadd.xlane.f32.xlu0 %v1953
        %v1981 = vpop.xlane.xlu0 %1980
        %1982 = vadd.xlane.f32.xlu0 %v1954
        %v1983 = vpop.xlane.xlu0 %1982
        %1984 = vadd.xlane.f32.xlu0 %v1955
        %v1985 = vpop.xlane.xlu0 %1984
        %1986 = vadd.xlane.f32.xlu0 %v1956
        %v1987 = vpop.xlane.xlu0 %1986
        %1988 = vadd.xlane.f32.xlu0 %v1957
        %v1989 = vpop.xlane.xlu0 %1988
        %v1990 = vmul.f32 %v1959, %v620
        %v1991 = vmul.f32 %v1961, %v620
        %v1992 = vmul.f32 %v1963, %v620
        %v1993 = vmul.f32 %v1965, %v620
        %v1994 = vmul.f32 %v1967, %v620
        %v1995 = vmul.f32 %v1969, %v620
        %v1996 = vmul.f32 %v1971, %v620
        %v1997 = vmul.f32 %v1973, %v620
        %v1998 = vmul.f32 %v1975, %v620
        %v1999 = vmul.f32 %v1977, %v620
        %v2000 = vmul.f32 %v1979, %v620
        %v2001 = vmul.f32 %v1981, %v620
        %v2002 = vmul.f32 %v1983, %v620
        %v2003 = vmul.f32 %v1985, %v620
        %v2004 = vmul.f32 %v1987, %v620
        %v2005 = vmul.f32 %v1989, %v620
        %v2006 = vmul.f32 %v1926, %v1926
        %v2007 = vmul.f32 %v1927, %v1927
        %v2008 = vmul.f32 %v1928, %v1928
        %v2009 = vmul.f32 %v1929, %v1929
        %v2010 = vmul.f32 %v1930, %v1930
        %v2011 = vmul.f32 %v1931, %v1931
        %v2012 = vmul.f32 %v1932, %v1932
        %v2013 = vmul.f32 %v1933, %v1933
        %v2014 = vmul.f32 %v1934, %v1934
        %v2015 = vmul.f32 %v1935, %v1935
        %v2016 = vmul.f32 %v1936, %v1936
        %v2017 = vmul.f32 %v1937, %v1937
        %v2018 = vmul.f32 %v1938, %v1938
        %v2019 = vmul.f32 %v1939, %v1939
        %v2020 = vmul.f32 %v1940, %v1940
        %v2021 = vmul.f32 %v1941, %v1941
        %v2022 = vsub.f32 %v1990, %v2006
        %v2023 = vsub.f32 %v1991, %v2007
        %v2024 = vsub.f32 %v1992, %v2008
        %v2025 = vsub.f32 %v1993, %v2009
        %v2026 = vsub.f32 %v1994, %v2010
        %v2027 = vsub.f32 %v1995, %v2011
        %v2028 = vsub.f32 %v1996, %v2012
        %v2029 = vsub.f32 %v1997, %v2013
        %v2030 = vsub.f32 %v1998, %v2014
        %v2031 = vsub.f32 %v1999, %v2015
        %v2032 = vsub.f32 %v2000, %v2016
        %v2033 = vsub.f32 %v2001, %v2017
        %v2034 = vsub.f32 %v2002, %v2018
        %v2035 = vsub.f32 %v2003, %v2019
        %v2036 = vsub.f32 %v2004, %v2020
        %v2037 = vsub.f32 %v2005, %v2021
        %v2038 = vmax.f32 %v2022, 0.0
        %v2039 = vmax.f32 %v2023, 0.0
        %v2040 = vmax.f32 %v2024, 0.0
        %v2041 = vmax.f32 %v2025, 0.0
        %v2042 = vmax.f32 %v2026, 0.0
        %v2043 = vmax.f32 %v2027, 0.0
        %v2044 = vmax.f32 %v2028, 0.0
        %v2045 = vmax.f32 %v2029, 0.0
        %v2046 = vmax.f32 %v2030, 0.0
        %v2047 = vmax.f32 %v2031, 0.0
        %v2048 = vmax.f32 %v2032, 0.0
        %v2049 = vmax.f32 %v2033, 0.0
        %v2050 = vmax.f32 %v2034, 0.0
        %v2051 = vmax.f32 %v2035, 0.0
        %v2052 = vmax.f32 %v2036, 0.0
        %v2053 = vmax.f32 %v2037, 0.0
        %v2054 = vsub.f32 %v1878, %v1926
        %v2055 = vsub.f32 %v1879, %v1927
        %v2056 = vsub.f32 %v1880, %v1928
        %v2057 = vsub.f32 %v1881, %v1929
        %v2058 = vsub.f32 %v1882, %v1930
        %v2059 = vsub.f32 %v1883, %v1931
        %v2060 = vsub.f32 %v1884, %v1932
        %v2061 = vsub.f32 %v1885, %v1933
        %v2062 = vsub.f32 %v1886, %v1934
        %v2063 = vsub.f32 %v1887, %v1935
        %v2064 = vsub.f32 %v1888, %v1936
        %v2065 = vsub.f32 %v1889, %v1937
        %v2066 = vsub.f32 %v1890, %v1938
        %v2067 = vsub.f32 %v1891, %v1939
        %v2068 = vsub.f32 %v1892, %v1940
        %v2069 = vsub.f32 %v1893, %v1941
        %v2070 = vadd.f32 %v2038, 1e-05
        %v2071 = vadd.f32 %v2039, 1e-05
        %v2072 = vadd.f32 %v2040, 1e-05
        %v2073 = vadd.f32 %v2041, 1e-05
        %v2074 = vadd.f32 %v2042, 1e-05
        %v2075 = vadd.f32 %v2043, 1e-05
        %v2076 = vadd.f32 %v2044, 1e-05
        %v2077 = vadd.f32 %v2045, 1e-05
        %v2078 = vadd.f32 %v2046, 1e-05
        %v2079 = vadd.f32 %v2047, 1e-05
        %v2080 = vadd.f32 %v2048, 1e-05
        %v2081 = vadd.f32 %v2049, 1e-05
        %v2082 = vadd.f32 %v2050, 1e-05
        %v2083 = vadd.f32 %v2051, 1e-05
        %v2084 = vadd.f32 %v2052, 1e-05
        %v2085 = vadd.f32 %v2053, 1e-05
        %v2086 = vrsqrt.pop %v2070
        %v2087 = vrsqrt.pop %v2071
        %v2088 = vrsqrt.pop %v2072
        %v2089 = vrsqrt.pop %v2073
        %v2090 = vrsqrt.pop %v2074
        %v2091 = vrsqrt.pop %v2075
        %v2092 = vrsqrt.pop %v2076
        %v2093 = vrsqrt.pop %v2077
        %v2094 = vrsqrt.pop %v2078
        %v2095 = vrsqrt.pop %v2079
        %v2096 = vrsqrt.pop %v2080
        %v2097 = vrsqrt.pop %v2081
        %v2098 = vrsqrt.pop %v2082
        %v2099 = vrsqrt.pop %v2083
        %v2100 = vrsqrt.pop %v2084
        %v2101 = vrsqrt.pop %v2085
        %v2102 = vmul.f32 %v2054, %v2086
        %v2103 = vmul.f32 %v2055, %v2087
        %v2104 = vmul.f32 %v2056, %v2088
        %v2105 = vmul.f32 %v2057, %v2089
        %v2106 = vmul.f32 %v2058, %v2090
        %v2107 = vmul.f32 %v2059, %v2091
        %v2108 = vmul.f32 %v2060, %v2092
        %v2109 = vmul.f32 %v2061, %v2093
        %v2110 = vmul.f32 %v2062, %v2094
        %v2111 = vmul.f32 %v2063, %v2095
        %v2112 = vmul.f32 %v2064, %v2096
        %v2113 = vmul.f32 %v2065, %v2097
        %v2114 = vmul.f32 %v2066, %v2098
        %v2115 = vmul.f32 %v2067, %v2099
        %v2116 = vmul.f32 %v2068, %v2100
        %v2117 = vmul.f32 %v2069, %v2101
        %v2118 = vadd.f32 %v1740, %v2102
        %v2119 = vadd.f32 %v1741, %v2103
        %v2120 = vadd.f32 %v1742, %v2104
        %v2121 = vadd.f32 %v1743, %v2105
        %v2122 = vadd.f32 %v1744, %v2106
        %v2123 = vadd.f32 %v1745, %v2107
        %v2124 = vadd.f32 %v1746, %v2108
        %v2125 = vadd.f32 %v1747, %v2109
        %v2126 = vadd.f32 %v1748, %v2110
        %v2127 = vadd.f32 %v1749, %v2111
        %v2128 = vadd.f32 %v1750, %v2112
        %v2129 = vadd.f32 %v1751, %v2113
        %v2130 = vadd.f32 %v1752, %v2114
        %v2131 = vadd.f32 %v1753, %v2115
        %v2132 = vadd.f32 %v1754, %v2116
        %v2133 = vadd.f32 %v1755, %v2117
        %v2134 = vmul.f32 %v2118, 0.5
        %v2135 = vmul.f32 %v2119, 0.5
        %v2136 = vmul.f32 %v2120, 0.5
        %v2137 = vmul.f32 %v2121, 0.5
        %v2138 = vmul.f32 %v2122, 0.5
        %v2139 = vmul.f32 %v2123, 0.5
        %v2140 = vmul.f32 %v2124, 0.5
        %v2141 = vmul.f32 %v2125, 0.5
        %v2142 = vmul.f32 %v2126, 0.5
        %v2143 = vmul.f32 %v2127, 0.5
        %v2144 = vmul.f32 %v2128, 0.5
        %v2145 = vmul.f32 %v2129, 0.5
        %v2146 = vmul.f32 %v2130, 0.5
        %v2147 = vmul.f32 %v2131, 0.5
        %v2148 = vmul.f32 %v2132, 0.5
        %v2149 = vmul.f32 %v2133, 0.5
        %v2150 = vld [vmem:[%s8] sm:$0x1]
        %v2152 = vlaneseq
        %v2153 = vshrl.u32 %v2152, 7
        %v2154 = vsub.s32 0, %v2153
        %v2155 = vrot.slane %v2150, %v2154
        %v2157 = vmul.f32 %v2134, %v2155
        %v2158 = vmul.f32 %v2135, %v2155
        %v2159 = vmul.f32 %v2136, %v2155
        %v2160 = vmul.f32 %v2137, %v2155
        %v2161 = vmul.f32 %v2138, %v2155
        %v2162 = vmul.f32 %v2139, %v2155
        %v2163 = vmul.f32 %v2140, %v2155
        %v2164 = vmul.f32 %v2141, %v2155
        %v2165 = vmul.f32 %v2142, %v2155
        %v2166 = vmul.f32 %v2143, %v2155
        %v2167 = vmul.f32 %v2144, %v2155
        %v2168 = vmul.f32 %v2145, %v2155
        %v2169 = vmul.f32 %v2146, %v2155
        %v2170 = vmul.f32 %v2147, %v2155
        %v2171 = vmul.f32 %v2148, %v2155
        %v2172 = vmul.f32 %v2149, %v2155
        %v2173 = vld [vmem:[%s9] sm:$0x1]
        %v2175 = vlaneseq
        %v2176 = vshrl.u32 %v2175, 7
        %v2177 = vsub.s32 0, %v2176
        %v2178 = vrot.slane %v2173, %v2177
        %v2180 = vadd.f32 %v2157, %v2178
        %v2181 = vadd.f32 %v2158, %v2178
        %v2182 = vadd.f32 %v2159, %v2178
        %v2183 = vadd.f32 %v2160, %v2178
        %v2184 = vadd.f32 %v2161, %v2178
        %v2185 = vadd.f32 %v2162, %v2178
        %v2186 = vadd.f32 %v2163, %v2178
        %v2187 = vadd.f32 %v2164, %v2178
        %v2188 = vadd.f32 %v2165, %v2178
        %v2189 = vadd.f32 %v2166, %v2178
        %v2190 = vadd.f32 %v2167, %v2178
        %v2191 = vadd.f32 %v2168, %v2178
        %v2192 = vadd.f32 %v2169, %v2178
        %v2193 = vadd.f32 %v2170, %v2178
        %v2194 = vadd.f32 %v2171, %v2178
        %v2195 = vadd.f32 %v2172, %v2178
        %v2196 = vmax.f32 %v2180, 0.0
        %v2197 = vmax.f32 %v2181, 0.0
        %v2198 = vmax.f32 %v2182, 0.0
        %v2199 = vmax.f32 %v2183, 0.0
        %v2200 = vmax.f32 %v2184, 0.0
        %v2201 = vmax.f32 %v2185, 0.0
        %v2202 = vmax.f32 %v2186, 0.0
        %v2203 = vmax.f32 %v2187, 0.0
        %v2204 = vmax.f32 %v2188, 0.0
        %v2205 = vmax.f32 %v2189, 0.0
        %v2206 = vmax.f32 %v2190, 0.0
        %v2207 = vmax.f32 %v2191, 0.0
        %v2208 = vmax.f32 %v2192, 0.0
        %v2209 = vmax.f32 %v2193, 0.0
        %v2210 = vmax.f32 %v2194, 0.0
        %v2211 = vmax.f32 %v2195, 0.0
        %v2212 = vld [vmem:[#allocation11] sm:$0xff]
        %v2213 = vld [vmem:[#allocation11 + $0x8] sm:$0xff]
        %v2214 = vld [vmem:[#allocation11 + $0x10] sm:$0xff]
        %v2215 = vld [vmem:[#allocation11 + $0x18] sm:$0xff]
        %v2216 = vld [vmem:[#allocation11 + $0x20] sm:$0xff]
        %v2217 = vld [vmem:[#allocation11 + $0x28] sm:$0xff]
        %v2218 = vld [vmem:[#allocation11 + $0x30] sm:$0xff]
        %v2219 = vld [vmem:[#allocation11 + $0x38] sm:$0xff]
        %v2220 = vld [vmem:[#allocation11 + $0x40] sm:$0xff]
        %v2221 = vld [vmem:[#allocation11 + $0x48] sm:$0xff]
        %v2222 = vld [vmem:[#allocation11 + $0x50] sm:$0xff]
        %v2223 = vld [vmem:[#allocation11 + $0x58] sm:$0xff]
        %v2224 = vld [vmem:[#allocation11 + $0x60] sm:$0xff]
        %v2225 = vld [vmem:[#allocation11 + $0x68] sm:$0xff]
        %v2226 = vld [vmem:[#allocation11 + $0x70] sm:$0xff]
        %v2227 = vld [vmem:[#allocation11 + $0x78] sm:$0xff]
        %2228 = vmatprep.subr.mxu0 0.0
        %2229 = vmatpush1.msra.mxu0 %v2212
        %2230 = vmatprep.subr.mxu0 0.0
        %2231 = vmatpush1.msra.mxu0 %v2213
        %2232 = vmatprep.subr.mxu0 0.0
        %2233 = vmatpush1.msra.mxu0 %v2214
        %2234 = vmatprep.subr.mxu0 0.0
        %2235 = vmatpush1.msra.mxu0 %v2215
        %2236 = vmatprep.subr.mxu0 0.0
        %2237 = vmatpush1.msra.mxu0 %v2216
        %2238 = vmatprep.subr.mxu0 0.0
        %2239 = vmatpush1.msra.mxu0 %v2217
        %2240 = vmatprep.subr.mxu0 0.0
        %2241 = vmatpush1.msra.mxu0 %v2218
        %2242 = vmatprep.subr.mxu0 0.0
        %2243 = vmatpush1.msra.mxu0 %v2219
        %2244 = vmatprep.subr.mxu0 0.0
        %2245 = vmatpush1.msra.mxu0 %v2220
        %2246 = vmatprep.subr.mxu0 0.0
        %2247 = vmatpush1.msra.mxu0 %v2221
        %2248 = vmatprep.subr.mxu0 0.0
        %2249 = vmatpush1.msra.mxu0 %v2222
        %2250 = vmatprep.subr.mxu0 0.0
        %2251 = vmatpush1.msra.mxu0 %v2223
        %2252 = vmatprep.subr.mxu0 0.0
        %2253 = vmatpush1.msra.mxu0 %v2224
        %2254 = vmatprep.subr.mxu0 0.0
        %2255 = vmatpush1.msra.mxu0 %v2225
        %2256 = vmatprep.subr.mxu0 0.0
        %2257 = vmatpush1.msra.mxu0 %v2226
        %2258 = vmatprep.subr.mxu0 0.0
        %2259 = vmatpush1.msra.mxu0 %v2227
        %2260 = vmatprep.subr.mxu0 0.0
        %2261 = vmatpush1.msra.mxu0 0.0
        %2262 = vmatprep.subr.mxu0 0.0
        %2263 = vmatpush1.msra.mxu0 0.0
        %2264 = vmatprep.subr.mxu0 0.0
        %2265 = vmatpush1.msra.mxu0 0.0
        %2266 = vmatprep.subr.mxu0 0.0
        %2267 = vmatpush1.msra.mxu0 0.0
        %2268 = vmatprep.subr.mxu0 0.0
        %2269 = vmatpush1.msra.mxu0 0.0
        %2270 = vmatprep.subr.mxu0 0.0
        %2271 = vmatpush1.msra.mxu0 0.0
        %2272 = vmatprep.subr.mxu0 0.0
        %2273 = vmatpush1.msra.mxu0 0.0
        %2274 = vmatprep.subr.mxu0 0.0
        %2275 = vmatpush1.msra.mxu0 0.0
        %2276 = vmatprep.subr.mxu0 0.0
        %2277 = vmatpush1.msra.mxu0 0.0
        %2278 = vmatprep.subr.mxu0 0.0
        %2279 = vmatpush1.msra.mxu0 0.0
        %2280 = vmatprep.subr.mxu0 0.0
        %2281 = vmatpush1.msra.mxu0 0.0
        %2282 = vmatprep.subr.mxu0 0.0
        %2283 = vmatpush1.msra.mxu0 0.0
        %2284 = vmatprep.subr.mxu0 0.0
        %2285 = vmatpush1.msra.mxu0 0.0
        %2286 = vmatprep.subr.mxu0 0.0
        %2287 = vmatpush1.msra.mxu0 0.0
        %2288 = vmatprep.subr.mxu0 0.0
        %2289 = vmatpush1.msra.mxu0 0.0
        %2290 = vmatprep.subr.mxu0 0.0
        %2291 = vmatpush1.msra.mxu0 0.0
        %2292 = vmatprep.mubr.f32.mxu0 0.0
        %2293 = vmatmul.mubr.f32.gmra.mrb[0].mxu0 %v2196
        %v2294 = vpop.f32.mrb[0].mxu0
        %v2295 = vadd.f32 0.0, %v2294
        %v2296 = vpop.f32.mrb[0].mxu0
        %2297 = vmatprep.mubr.f32.mxu0 0.0
        %2298 = vmatmul.mubr.f32.gmra.mrb[0].mxu0 %v2197
        %v2299 = vpop.f32.mrb[0].mxu0
        %v2300 = vadd.f32 0.0, %v2299
        %v2301 = vpop.f32.mrb[0].mxu0
        %2302 = vmatprep.mubr.f32.mxu0 0.0
        %2303 = vmatmul.mubr.f32.gmra.mrb[0].mxu0 %v2198
        %v2304 = vpop.f32.mrb[0].mxu0
        %v2305 = vadd.f32 0.0, %v2304
        %v2306 = vpop.f32.mrb[0].mxu0
        %2307 = vmatprep.mubr.f32.mxu0 0.0
        %2308 = vmatmul.mubr.f32.gmra.mrb[0].mxu0 %v2199
        %v2309 = vpop.f32.mrb[0].mxu0
        %v2310 = vadd.f32 0.0, %v2309
        %v2311 = vpop.f32.mrb[0].mxu0
        %2312 = vmatprep.mubr.f32.mxu0 0.0
        %2313 = vmatmul.mubr.f32.gmra.mrb[0].mxu0 %v2200
        %v2314 = vpop.f32.mrb[0].mxu0
        %v2315 = vadd.f32 0.0, %v2314
        %v2316 = vpop.f32.mrb[0].mxu0
        %2317 = vmatprep.mubr.f32.mxu0 0.0
        %2318 = vmatmul.mubr.f32.gmra.mrb[0].mxu0 %v2201
        %v2319 = vpop.f32.mrb[0].mxu0
        %v2320 = vadd.f32 0.0, %v2319
        %v2321 = vpop.f32.mrb[0].mxu0
        %2322 = vmatprep.mubr.f32.mxu0 0.0
        %2323 = vmatmul.mubr.f32.gmra.mrb[0].mxu0 %v2202
        %v2324 = vpop.f32.mrb[0].mxu0
        %v2325 = vadd.f32 0.0, %v2324
        %v2326 = vpop.f32.mrb[0].mxu0
        %2327 = vmatprep.mubr.f32.mxu0 0.0
        %2328 = vmatmul.mubr.f32.gmra.mrb[0].mxu0 %v2203
        %v2329 = vpop.f32.mrb[0].mxu0
        %v2330 = vadd.f32 0.0, %v2329
        %v2331 = vpop.f32.mrb[0].mxu0
        %2332 = vmatprep.mubr.f32.mxu0 0.0
        %2333 = vmatmul.mubr.f32.gmra.mrb[0].mxu0 %v2204
        %v2334 = vpop.f32.mrb[0].mxu0
        %v2335 = vadd.f32 0.0, %v2334
        %v2336 = vpop.f32.mrb[0].mxu0
        %2337 = vmatprep.mubr.f32.mxu0 0.0
        %2338 = vmatmul.mubr.f32.gmra.mrb[0].mxu0 %v2205
        %v2339 = vpop.f32.mrb[0].mxu0
        %v2340 = vadd.f32 0.0, %v2339
        %v2341 = vpop.f32.mrb[0].mxu0
        %2342 = vmatprep.mubr.f32.mxu0 0.0
        %2343 = vmatmul.mubr.f32.gmra.mrb[0].mxu0 %v2206
        %v2344 = vpop.f32.mrb[0].mxu0
        %v2345 = vadd.f32 0.0, %v2344
        %v2346 = vpop.f32.mrb[0].mxu0
        %2347 = vmatprep.mubr.f32.mxu0 0.0
        %2348 = vmatmul.mubr.f32.gmra.mrb[0].mxu0 %v2207
        %v2349 = vpop.f32.mrb[0].mxu0
        %v2350 = vadd.f32 0.0, %v2349
        %v2351 = vpop.f32.mrb[0].mxu0
        %2352 = vmatprep.mubr.f32.mxu0 0.0
        %2353 = vmatmul.mubr.f32.gmra.mrb[0].mxu0 %v2208
        %v2354 = vpop.f32.mrb[0].mxu0
        %v2355 = vadd.f32 0.0, %v2354
        %v2356 = vpop.f32.mrb[0].mxu0
        %2357 = vmatprep.mubr.f32.mxu0 0.0
        %2358 = vmatmul.mubr.f32.gmra.mrb[0].mxu0 %v2209
        %v2359 = vpop.f32.mrb[0].mxu0
        %v2360 = vadd.f32 0.0, %v2359
        %v2361 = vpop.f32.mrb[0].mxu0
        %2362 = vmatprep.mubr.f32.mxu0 0.0
        %2363 = vmatmul.mubr.f32.gmra.mrb[0].mxu0 %v2210
        %v2364 = vpop.f32.mrb[0].mxu0
        %v2365 = vadd.f32 0.0, %v2364
        %v2366 = vpop.f32.mrb[0].mxu0
        %2367 = vmatprep.mubr.f32.mxu0 0.0
        %2368 = vmatmul.mubr.f32.gmra.mrb[0].mxu0 %v2211
        %v2369 = vpop.f32.mrb[0].mxu0
        %v2370 = vadd.f32 0.0, %v2369
        %v2371 = vpop.f32.mrb[0].mxu0
        %2372 = vdwg.mxu0
        %2373 = vst [vmem:[%s551] sm:$0xff] %v2295
        %2374 = vst [vmem:[%s551 + $0x8] sm:$0xff] %v2300
        %2375 = vst [vmem:[%s551 + $0x10] sm:$0xff] %v2305
        %2376 = vst [vmem:[%s551 + $0x18] sm:$0xff] %v2310
        %2377 = vst [vmem:[%s551 + $0x20] sm:$0xff] %v2315
        %2378 = vst [vmem:[%s551 + $0x28] sm:$0xff] %v2320
        %2379 = vst [vmem:[%s551 + $0x30] sm:$0xff] %v2325
        %2380 = vst [vmem:[%s551 + $0x38] sm:$0xff] %v2330
        %2381 = vst [vmem:[%s551 + $0x40] sm:$0xff] %v2335
        %2382 = vst [vmem:[%s551 + $0x48] sm:$0xff] %v2340
        %2383 = vst [vmem:[%s551 + $0x50] sm:$0xff] %v2345
        %2384 = vst [vmem:[%s551 + $0x58] sm:$0xff] %v2350
        %2385 = vst [vmem:[%s551 + $0x60] sm:$0xff] %v2355
        %2386 = vst [vmem:[%s551 + $0x68] sm:$0xff] %v2360
        %2387 = vst [vmem:[%s551 + $0x70] sm:$0xff] %v2365
        %2388 = vst [vmem:[%s551 + $0x78] sm:$0xff] %v2370
        %s2389 = sand.u32 %s287, 1
        %s2390 = scalar_lea.sflag [#allocation4], %s2389
        %s2391 = sand.u32 %s287, 1
        %s2392 = smul.addr %s2391, 128
        %s2393 = scalar_lea.vmem [#allocation13], %s2392
        // Predicated region
        $region89: #{tpu_custom_call.1} parent=63 // pred_check
          %p2394 = pneg %p297
        $region90: #{tpu_custom_call.1} parent=63 // pred_check_branch
          %2396 = sbr.rel (%p2394) target = $region92
        $region91: #{tpu_custom_call.1} parent=63 // pred_region
          %s2397 = smul.u32 8, %s33
          %s2399 = ssub.s32 2048, 2048
          %2400 = vsyncadd %s2390, %s2399
          %s2401 = smul.addr %s2397, 2
          %s2402 = smul.addr %s2401, 128
          %s2403 = scalar_lea.hbm %s11, %s2402
          %s2404 = sshll.u32 %s2393, 4
          %s2405 = int_to_ptr.vmem [resolvable:$true] %s2404
          %2410 = dma.vmem_to_hbm [thread:$0]  %s2405, 2048, %s2403, %s2390, 128, 128, 8
        $region92: #{tpu_custom_call.1} parent=63 // pred_fallthru
          _
      $region64: #{tpu_custom_call.1} parent=5 // pred_fallthru
        _
      %p2411 = scmp.le.s32.totalorder 2, %s28
      // Predicated region
      $region93: #{tpu_custom_call.1} parent=5 // pred_check
        %p2412 = pneg %p2411
      $region94: #{tpu_custom_call.1} parent=5 // pred_check_branch
        %2414 = sbr.rel (%p2412) target = $region96
      $region95: #{tpu_custom_call.1} parent=5 // pred_region
        %s2415 = ssub.s32 %s28, 2
        // Predicated region
        $region97: #{tpu_custom_call.1} parent=95 // pred_check
          %p2416 = pneg %p303
        $region98: #{tpu_custom_call.1} parent=95 // pred_check_branch
          %2418 = sbr.rel (%p2416) target = $region100
        $region99: #{tpu_custom_call.1} parent=95 // pred_region
          %s2419 = sand.u32 %s288, 1
          %s2420 = scalar_lea.sflag [#allocation4], %s2419
          %s2421 = sand.u32 %s288, 1
          %s2422 = smul.addr %s2421, 128
          %s2423 = scalar_lea.vmem [#allocation13], %s2422
          %2424 = dma.done %s2420, 2048
        $region100: #{tpu_custom_call.1} parent=95 // pred_fallthru
          _
      $region96: #{tpu_custom_call.1} parent=5 // pred_fallthru
        _
    $region6: #{tpu_custom_call.1} parent=1 // loop_footer
      %s32 = sadd.s32 1, %s28
    $region7: #{tpu_custom_call.1} parent=1 // loop_footer_branch
      %27 = sbr.rel target = $region3
    $region8: #{tpu_custom_call.1} parent=1 // loop_exit
      _
    %2425 = vsyncpa [#allocation3], 1
    %s2426 = scalar_lea.sflag [#allocation3], 1
    %2427 = vsyncpa %s2426, 1
    %2428 = vsyncpa [#allocation6], 1
    %s2429 = scalar_lea.sflag [#allocation6], 1
    %2430 = vsyncpa %s2429, 1
    %2431 = vsyncpa [#allocation9], 1
    %2432 = vsyncpa [#allocation12], 1
    %2433 = vsyncpa [#allocation4], 1
    %s2434 = scalar_lea.sflag [#allocation4], 1
    %2435 = vsyncpa %s2434, 1

</llo_original>
